<compile_context>
chip_gen: v7x
topology: tpu7x:2x2x1
jax: 0.10.0
libtpu: 0.0.40
codegen_flags: <defaults>
</compile_context>

<pallas_src>
import functools

import jax
import jax.numpy as jnp
from jax.experimental import pallas as pl
from jax.experimental.pallas import tpu as pltpu


def _round_up(x, m):
    return (x + m - 1) // m * m


def _link_predictor_kernel(xi_ref, xj_ref,
                           w1_ref, b1_ref,
                           w2_ref, b2_ref,
                           w3_ref, b3_ref,
                           o_ref, *, mxu_dtype):
    # Hadamard of the two node embeddings. Upcast to f32 so bf16-streamed
    # inputs work on all generations (v5e VPU/EUP have no bf16 path); the
    # upcast is cheap VPU work hidden under the input DMA.
    x = xi_ref[...].astype(jnp.float32) * xj_ref[...].astype(jnp.float32)

    # Hidden layer 1: Linear -> ReLU (eval-mode dropout == identity).
    # Weights are pre-cast to mxu_dtype in the wrapper; accumulate in f32.
    h = jnp.dot(x.astype(mxu_dtype), w1_ref[...],
                preferred_element_type=jnp.float32) + b1_ref[...]
    h = jnp.maximum(h, 0.0)

    # Hidden layer 2: Linear -> ReLU.
    h = jnp.dot(h.astype(mxu_dtype), w2_ref[...],
                preferred_element_type=jnp.float32) + b2_ref[...]
    h = jnp.maximum(h, 0.0)

    # Output layer with the block-diagonal (pack*hid, pack*out) weight:
    # M = bn_p (large), K = pack*hid, N = pack*out; the tiny weight is the
    # stationary MXU operand, so there is no per-tile weight reload.
    z = jnp.dot(h.astype(mxu_dtype), w3_ref[...],
                preferred_element_type=jnp.float32) + b3_ref[...]
    o_ref[...] = jax.nn.sigmoid(z).astype(o_ref.dtype)


@functools.partial(jax.jit, static_argnames=("block_rows", "mxu_bf16"))
def link_predictor_forward(x_i, x_j, params, *, block_rows=8192, mxu_bf16=None):
    """LinkPredictor forward (eval mode).

    params = (w1, b1, w2, b2, w3, b3) in natural layout:
      w1: (in, hid)   b1: (1, hid)
      w2: (hid, hid)  b2: (1, hid)
      w3: (hid, out)  b3: (1, out)
    Returns an (N, out) array, matching the PyTorch module.
    """
    w1, b1, w2, b2, w3, b3 = params
    n, in_c = x_i.shape
    hid = w1.shape[1]
    out_c = w3.shape[1]

    # ---- channel packing: fill all 128 lanes --------------------------------
    # pack rows per packed row so that pack*in_c == 128 lanes (when in_c is a
    # power-of-two divisor of 128); reduce pack until it divides N so no
    # padding copy is ever needed.
    pack = 128 // in_c if (in_c <= 128 and 128 % in_c == 0) else 1
    while pack > 1 and n % pack:
        pack //= 2
    n_p = n // pack
    w_in = pack * in_c
    w_hid = pack * hid
    w_out = pack * out_c

    if pack > 1:
        # Row-major (N, C) -> (N/pack, pack*C) is a free (bitcast) reshape.
        x_i = x_i.reshape(n_p, w_in)
        x_j = x_j.reshape(n_p, w_in)

    # MXU operand dtype: bf16 operands + f32 accumulation when the inputs are
    # already bf16 (or explicitly forced); exact f32 multi-pass otherwise.
    if mxu_bf16 is None:
        mxu_bf16 = (x_i.dtype == jnp.bfloat16)
    mxu_dtype = jnp.bfloat16 if mxu_bf16 else jnp.float32

    # Block-diagonal weights (pack independent copies) so packed rows never
    # mix; biases tiled per group. Tiny one-time XLA work (<=128x128 arrays).
    eye = jnp.eye(pack, dtype=jnp.float32)
    w1_b = jnp.kron(eye, w1.astype(jnp.float32)).astype(mxu_dtype)   # (w_in,  w_hid)
    w2_b = jnp.kron(eye, w2.astype(jnp.float32)).astype(mxu_dtype)   # (w_hid, w_hid)
    w3_b = jnp.kron(eye, w3.astype(jnp.float32)).astype(mxu_dtype)   # (w_hid, w_out)
    b1_b = jnp.tile(b1.astype(jnp.float32), (1, pack))               # (1, w_hid)
    b2_b = jnp.tile(b2.astype(jnp.float32), (1, pack))               # (1, w_hid)
    b3_b = jnp.tile(b3.astype(jnp.float32), (1, pack))               # (1, w_out)

    # ---- batch-tile / grid selection ----------------------------------------
    # Big tiles amortize the ~0.35us/grid-step overhead; keep >= 4 steps and an
    # even grid so v7x's two TensorCores each run >= 2 pipelined steps. Partial
    # last block handled by Pallas (no wrapper padding).
    max_bn_p = max(8, min(block_rows, 8192) // pack)   # ~1 MiB/input buffer @ f32
    if n_p <= 64:
        bn_p, grid = n_p, 1                             # tiny batch: single block
    else:
        steps = max(4, pl.cdiv(n_p, max_bn_p))
        if steps % 2:
            steps += 1
        bn_p = min(_round_up(pl.cdiv(n_p, steps), 8), max_bn_p)
        grid = pl.cdiv(n_p, bn_p)

    # Weights/biases are tiny: each is a single resident block (constant
    # index_map); only the packed-batch axis is tiled.
    full = lambda r, c: pl.BlockSpec((r, c), lambda i: (0, 0))
    kernel = functools.partial(_link_predictor_kernel, mxu_dtype=mxu_dtype)

    out_p = pl.pallas_call(
        kernel,
        out_shape=jax.ShapeDtypeStruct((n_p, w_out), jnp.float32),
        grid_spec=pltpu.PrefetchScalarGridSpec(
            num_scalar_prefetch=0,
            grid=(grid,),
            in_specs=[
                pl.BlockSpec((bn_p, w_in), lambda i: (i, 0)),   # x_i packed tile
                pl.BlockSpec((bn_p, w_in), lambda i: (i, 0)),   # x_j packed tile
                full(w_in, w_hid),    # w1 block-diag
                full(1, w_hid),       # b1 tiled
                full(w_hid, w_hid),   # w2 block-diag
                full(1, w_hid),       # b2 tiled
                full(w_hid, w_out),   # w3 block-diag
                full(1, w_out),       # b3 tiled
            ],
            out_specs=pl.BlockSpec((bn_p, w_out), lambda i: (i, 0)),
        ),
        compiler_params=pltpu.CompilerParams(
            dimension_semantics=("parallel",),
            vmem_limit_bytes=48 * 1024 * 1024),
    )(x_i, x_j, w1_b, b1_b, w2_b, b2_b, w3_b, b3_b)

    # (N/pack, pack*out) -> (N, out): a free row-major reshape in the wrapper.
    return out_p.reshape(n, out_c)


def init_params(key, in_channels, hidden_channels, out_channels):
    """Deterministic PyTorch-Linear-style init, natural (in, out) layout."""
    def linear(k, fan_in, fan_out):
        kw, kb = jax.random.split(k)
        bound = 1.0 / (fan_in ** 0.5)
        w = jax.random.uniform(kw, (fan_in, fan_out), jnp.float32, -bound, bound)
        b = jax.random.uniform(kb, (1, fan_out), jnp.float32, -bound, bound)
        return w, b

    k1, k2, k3 = jax.random.split(key, 3)
    w1, b1 = linear(k1, in_channels, hidden_channels)
    w2, b2 = linear(k2, hidden_channels, hidden_channels)
    w3, b3 = linear(k3, hidden_channels, out_channels)
    return (w1, b1, w2, b2, w3, b3)


def reference_forward(x_i, x_j, params):
    w1, b1, w2, b2, w3, b3 = params
    x = x_i.astype(jnp.float32) * x_j.astype(jnp.float32)
    x = jnp.maximum(x @ w1 + b1, 0.0)
    x = jnp.maximum(x @ w2 + b2, 0.0)
    return jax.nn.sigmoid(x @ w3 + b3)


if __name__ == "__main__":
    # LinkPredictor(in_channels=32, hidden_channels=32, out_channels=1,
    #               num_layers=3, dropout=0.5) in eval mode.
    in_channels, hidden_channels, out_channels = 32, 32, 1
    key = jax.random.PRNGKey(0)
    k_params = jax.random.fold_in(key, 0)
    params = init_params(k_params, in_channels, hidden_channels, out_channels)

    def run_case(batch, in_dtype, atol, name):
        kx, kj = jax.random.split(jax.random.fold_in(key, batch))
        x_i = jax.random.normal(kx, (batch, in_channels), jnp.float32)
        x_j = jax.random.normal(kj, (batch, in_channels), jnp.float32)
        ref = reference_forward(x_i, x_j, params)
        out = link_predictor_forward(x_i.astype(in_dtype),
                                     x_j.astype(in_dtype), params)
        out = jax.block_until_ready(out)
        assert out.shape == (batch, out_channels), name
        assert jnp.allclose(out, ref, atol=atol, rtol=atol), f"{name} mismatch"

    # Multi-step grid with a partial last block (3000/4 = 750 packed rows,
    # grid=4), f32 path: must match the reference tightly.
    run_case(3000, jnp.float32, 1e-5, "f32 multi-step")
    # Small batch (single full-extent block), packed path.
    run_case(200, jnp.float32, 1e-5, "f32 small")
    # Odd batch: pack falls back to 1 (unpacked path), no padding copy needed.
    run_case(203, jnp.float32, 1e-5, "f32 unpacked fallback")
    # bf16 input-streaming path (halves HBM bytes on the dominant streams,
    # bf16 MXU operands with f32 accumulation); looser tolerance.
    run_case(3000, jnp.bfloat16, 5e-2, "bf16 streaming")

    print("KERNEL_OK")
</pallas_src>

<mosaic_0001>
module attributes {stable_mosaic.version = 11 : i64} {
  func.func @_link_predictor_kernel(%arg0: i32, %arg1: memref<192x128xf32, #tpu.memory_space<vmem>>, %arg2: memref<192x128xf32, #tpu.memory_space<vmem>>, %arg3: memref<128x128xf32, #tpu.memory_space<vmem>>, %arg4: memref<1x128xf32, #tpu.memory_space<vmem>>, %arg5: memref<128x128xf32, #tpu.memory_space<vmem>>, %arg6: memref<1x128xf32, #tpu.memory_space<vmem>>, %arg7: memref<128x4xf32, #tpu.memory_space<vmem>>, %arg8: memref<1x4xf32, #tpu.memory_space<vmem>>, %arg9: memref<192x4xf32, #tpu.memory_space<vmem>>) attributes {dimension_semantics = [#tpu.dimension_semantics<parallel>], iteration_bounds = array<i64: 4>, scalar_prefetch = 0 : i64, scratch_operands = 0 : i64, tpu.core_type = #tpu.core_type<tc>, window_params = [{transform_indices = @transform_0, window_bounds = array<i64: 192, 128>}, {transform_indices = @transform_1, window_bounds = array<i64: 192, 128>}, {pipeline_mode = #tpu.pipeline_mode<synchronous>, transform_indices = @transform_2, window_bounds = array<i64: 128, 128>}, {pipeline_mode = #tpu.pipeline_mode<synchronous>, transform_indices = @transform_3, window_bounds = array<i64: 1, 128>}, {pipeline_mode = #tpu.pipeline_mode<synchronous>, transform_indices = @transform_4, window_bounds = array<i64: 128, 128>}, {pipeline_mode = #tpu.pipeline_mode<synchronous>, transform_indices = @transform_5, window_bounds = array<i64: 1, 128>}, {pipeline_mode = #tpu.pipeline_mode<synchronous>, transform_indices = @transform_6, window_bounds = array<i64: 128, 4>}, {pipeline_mode = #tpu.pipeline_mode<synchronous>, transform_indices = @transform_7, window_bounds = array<i64: 1, 4>}, {transform_indices = @transform_8, window_bounds = array<i64: 192, 4>}]} {
    %c0 = arith.constant 0 : index
    %c0_0 = arith.constant 0 : index
    %0 = vector.load %arg1[%c0, %c0_0] : memref<192x128xf32, #tpu.memory_space<vmem>>, vector<192x128xf32>
    %c0_1 = arith.constant 0 : index
    %c0_2 = arith.constant 0 : index
    %1 = vector.load %arg2[%c0_1, %c0_2] : memref<192x128xf32, #tpu.memory_space<vmem>>, vector<192x128xf32>
    %2 = arith.mulf %0, %1 : vector<192x128xf32>
    %c0_3 = arith.constant 0 : index
    %c0_4 = arith.constant 0 : index
    %3 = vector.load %arg3[%c0_3, %c0_4] : memref<128x128xf32, #tpu.memory_space<vmem>>, vector<128x128xf32>
    %cst = arith.constant dense<0.000000e+00> : vector<192x128xf32>
    %4 = tpu.matmul %2, %3, %cst {dimension_numbers = #tpu.dot_dimension_numbers<[1], [0], [0], [1], [0, 0, 1, 1], [], []>} : vector<192x128xf32>, vector<128x128xf32>, vector<192x128xf32> -> vector<192x128xf32>
    %c0_5 = arith.constant 0 : index
    %c0_6 = arith.constant 0 : index
    %5 = vector.load %arg4[%c0_5, %c0_6] : memref<1x128xf32, #tpu.memory_space<vmem>>, vector<1x128xf32>
    %6 = vector.broadcast %5 : vector<1x128xf32> to vector<192x128xf32>
    %7 = arith.addf %4, %6 : vector<192x128xf32>
    %cst_7 = arith.constant 0.000000e+00 : f32
    %8 = vector.broadcast %cst_7 : f32 to vector<192x128xf32>
    %9 = arith.maximumf %7, %8 : vector<192x128xf32>
    %c0_8 = arith.constant 0 : index
    %c0_9 = arith.constant 0 : index
    %10 = vector.load %arg5[%c0_8, %c0_9] : memref<128x128xf32, #tpu.memory_space<vmem>>, vector<128x128xf32>
    %cst_10 = arith.constant dense<0.000000e+00> : vector<192x128xf32>
    %11 = tpu.matmul %9, %10, %cst_10 {dimension_numbers = #tpu.dot_dimension_numbers<[1], [0], [0], [1], [0, 0, 1, 1], [], []>} : vector<192x128xf32>, vector<128x128xf32>, vector<192x128xf32> -> vector<192x128xf32>
    %c0_11 = arith.constant 0 : index
    %c0_12 = arith.constant 0 : index
    %12 = vector.load %arg6[%c0_11, %c0_12] : memref<1x128xf32, #tpu.memory_space<vmem>>, vector<1x128xf32>
    %13 = vector.broadcast %12 : vector<1x128xf32> to vector<192x128xf32>
    %14 = arith.addf %11, %13 : vector<192x128xf32>
    %cst_13 = arith.constant 0.000000e+00 : f32
    %15 = vector.broadcast %cst_13 : f32 to vector<192x128xf32>
    %16 = arith.maximumf %14, %15 : vector<192x128xf32>
    %c0_14 = arith.constant 0 : index
    %c0_15 = arith.constant 0 : index
    %17 = vector.load %arg7[%c0_14, %c0_15] : memref<128x4xf32, #tpu.memory_space<vmem>>, vector<128x4xf32>
    %cst_16 = arith.constant dense<0.000000e+00> : vector<192x4xf32>
    %18 = tpu.matmul %16, %17, %cst_16 {dimension_numbers = #tpu.dot_dimension_numbers<[1], [0], [0], [1], [0, 0, 1, 1], [], []>} : vector<192x128xf32>, vector<128x4xf32>, vector<192x4xf32> -> vector<192x4xf32>
    %c0_17 = arith.constant 0 : index
    %c0_18 = arith.constant 0 : index
    %19 = vector.load %arg8[%c0_17, %c0_18] : memref<1x4xf32, #tpu.memory_space<vmem>>, vector<1x4xf32>
    %20 = vector.broadcast %19 : vector<1x4xf32> to vector<192x4xf32>
    %21 = arith.addf %18, %20 : vector<192x4xf32>
    %22 = arith.negf %21 : vector<192x4xf32>
    %23 = math.exp %22 : vector<192x4xf32>
    %cst_19 = arith.constant 1.000000e+00 : f32
    %24 = vector.broadcast %cst_19 : f32 to vector<192x4xf32>
    %25 = arith.addf %24, %23 : vector<192x4xf32>
    %26 = arith.divf %24, %25 : vector<192x4xf32>
    %c0_20 = arith.constant 0 : index
    %c0_21 = arith.constant 0 : index
    %27 = vector.load %arg9[%c0_20, %c0_21] : memref<192x4xf32, #tpu.memory_space<vmem>>, vector<192x4xf32>
    tpu.vector_store %arg9[%c0_20, %c0_21], %26 {strides = array<i32>} : memref<192x4xf32, #tpu.memory_space<vmem>>, vector<192x4xf32>,
    return
  }
  func.func @transform_0(%arg0: i32) -> (i32, i32) {
    %c0_i32 = arith.constant 0 : i32
    %c0_i32_0 = arith.constant 0 : i32
    return %arg0, %c0_i32 : i32, i32
  }
  func.func @transform_1(%arg0: i32) -> (i32, i32) {
    %c0_i32 = arith.constant 0 : i32
    %c0_i32_0 = arith.constant 0 : i32
    return %arg0, %c0_i32 : i32, i32
  }
  func.func @transform_2(%arg0: i32) -> (i32, i32) {
    %c0_i32 = arith.constant 0 : i32
    %c0_i32_0 = arith.constant 0 : i32
    %c0_i32_1 = arith.constant 0 : i32
    return %c0_i32, %c0_i32_0 : i32, i32
  }
  func.func @transform_3(%arg0: i32) -> (i32, i32) {
    %c0_i32 = arith.constant 0 : i32
    %c0_i32_0 = arith.constant 0 : i32
    %c0_i32_1 = arith.constant 0 : i32
    return %c0_i32, %c0_i32_0 : i32, i32
  }
  func.func @transform_4(%arg0: i32) -> (i32, i32) {
    %c0_i32 = arith.constant 0 : i32
    %c0_i32_0 = arith.constant 0 : i32
    %c0_i32_1 = arith.constant 0 : i32
    return %c0_i32, %c0_i32_0 : i32, i32
  }
  func.func @transform_5(%arg0: i32) -> (i32, i32) {
    %c0_i32 = arith.constant 0 : i32
    %c0_i32_0 = arith.constant 0 : i32
    %c0_i32_1 = arith.constant 0 : i32
    return %c0_i32, %c0_i32_0 : i32, i32
  }
  func.func @transform_6(%arg0: i32) -> (i32, i32) {
    %c0_i32 = arith.constant 0 : i32
    %c0_i32_0 = arith.constant 0 : i32
    %c0_i32_1 = arith.constant 0 : i32
    return %c0_i32, %c0_i32_0 : i32, i32
  }
  func.func @transform_7(%arg0: i32) -> (i32, i32) {
    %c0_i32 = arith.constant 0 : i32
    %c0_i32_0 = arith.constant 0 : i32
    %c0_i32_1 = arith.constant 0 : i32
    return %c0_i32, %c0_i32_0 : i32, i32
  }
  func.func @transform_8(%arg0: i32) -> (i32, i32) {
    %c0_i32 = arith.constant 0 : i32
    %c0_i32_0 = arith.constant 0 : i32
    return %arg0, %c0_i32 : i32, i32
  }
}

</mosaic_0001>

<llo_original>
// kernel: link_predictor_forward.1
$region0: #{link_predictor_forward.1}
  #allocation0 [shape = 'u32[]', space=smem, size = 0x4, offset = 0x4, fixed_abs, tag = 'smem constant byte address 0x4 - core index']
  #allocation1 [shape = 'u32[144,128]{1,0:T(1,128)}', space=vmem, size = 0x12000, scoped, tag = 'internal scratch']
  %s0 = inlined_call_operand.vmem [shape: f32[750,128], index: 0, kind: input, shape index: {}]
  %s1 = inlined_call_operand.vmem [shape: f32[750,128], index: 1, kind: input, shape index: {}]
  %s2 = inlined_call_operand.vmem [shape: f32[128,128], index: 2, kind: input, shape index: {}]
  %s3 = inlined_call_operand.vmem [shape: f32[1,128], index: 3, kind: input, shape index: {}]
  %s4 = inlined_call_operand.vmem [shape: f32[128,128], index: 4, kind: input, shape index: {}]
  %s5 = inlined_call_operand.vmem [shape: f32[1,128], index: 5, kind: input, shape index: {}]
  %s6 = inlined_call_operand.vmem [shape: f32[128,4], index: 6, kind: input, shape index: {}]
  %s7 = inlined_call_operand.vmem [shape: f32[1,4], index: 7, kind: input, shape index: {}]
  %s8 = inlined_call_operand.vmem [shape: f32[750,4], index: 8, kind: output, shape index: {}]
  %s9 = sld [smem:[#allocation0]]
  $region113: #{link_predictor_forward.1} parent=0
    _
  %s11 = ssub.s32 1, %s9
  %s12 = scalar_select 0, %s11, %s9
  $region1: #{link_predictor_forward.1} parent=0
    #allocation2 [shape = 'u8[196608]{0}', space=vmem, size = 0x30000, scoped, tag = 'output window, operand 0']
    loop: start=0, step=1, limit=6
    $region2: #{link_predictor_forward.1} parent=1 // loop_pre_header
      _
    $region3: #{link_predictor_forward.1} parent=1 // loop_header
      %s14 = sphi 0, %s18
      %p15 = scmp.ge.s32.totalorder %s14, 6
      %s24 = sphi 0, %s26
      %s27 = sphi 0, %s24
      %s28 = sphi 0, %s27
      %s44 = sphi 0, %s28
      %s50 = sphi 0, %s52
      %s53 = sphi 0, %s50
      %s54 = sphi 0, %s53
      %s70 = sphi 0, %s54
      %s74 = sphi 0, %s74
      %s76 = sphi 0, %s74
      %s77 = sphi 0, %s76
      %s91 = sphi 0, %s77
      %s95 = sphi 0, %s95
      %s97 = sphi 0, %s95
      %s98 = sphi 0, %s97
      %s112 = sphi 0, %s98
      %s116 = sphi 0, %s116
      %s118 = sphi 0, %s116
      %s119 = sphi 0, %s118
      %s133 = sphi 0, %s119
      %s137 = sphi 0, %s137
      %s139 = sphi 0, %s137
      %s140 = sphi 0, %s139
      %s154 = sphi 0, %s140
      %s158 = sphi 0, %s158
      %s160 = sphi 0, %s158
      %s161 = sphi 0, %s160
      %s175 = sphi 0, %s161
      %s179 = sphi 0, %s179
      %s181 = sphi 0, %s179
      %s182 = sphi 0, %s181
      %s196 = sphi 0, %s182
      %s202 = sphi 0, %s204
      %s205 = sphi 0, %s202
      %s206 = sphi 0, %s205
      %s222 = sphi 0, %s206
    $region4: #{link_predictor_forward.1} parent=1 // loop_header_branch
      %17 = sbr.rel (%p15) target = $region8
    $region5: #{link_predictor_forward.1} parent=1 // loop_body
      %s19 = ssub.s32 %s14, 1
      %s20 = ssub.s32 %s14, 2
      %s21 = sadd.s32 %s14, 1
      %s22 = ssub.s32 %s14, %s21
      %p23 = scmp.eq.s32.totalorder %s22, 0
      %s25 = sadd.s32 %s24, 1
      %s26 = scalar_select %p23, %s24, %s25
      %p29 = pneg %p23
      %p30 = scmp.eq.s32.totalorder %s14, 3
      %p31 = por %p29, %p30
      %p32 = scmp.ne.s32.totalorder %s24, %s27
      %p33 = scmp.eq.s32.totalorder %s14, 0
      %p34 = por %p32, %p33
      %p35 = scmp.ne.s32.totalorder %s24, %s27
      %p36 = scmp.eq.s32.totalorder %s19, 3
      %p37 = por %p35, %p36
      %p38 = scmp.ne.s32.totalorder %s27, %s28
      %p39 = scmp.eq.s32.totalorder %s19, 0
      %p40 = por %p38, %p39
      %p41 = scmp.ne.s32.totalorder %s27, %s28
      %p42 = scmp.eq.s32.totalorder %s20, 3
      %p43 = por %p41, %p42
      %p45 = scmp.ne.s32.totalorder %s28, %s44
      %p46 = scmp.eq.s32.totalorder %s20, 0
      %p47 = por %p45, %p46
      %s48 = ssub.s32 %s14, %s21
      %p49 = scmp.eq.s32.totalorder %s48, 0
      %s51 = sadd.s32 %s50, 1
      %s52 = scalar_select %p49, %s50, %s51
      %p55 = pneg %p49
      %p56 = scmp.eq.s32.totalorder %s14, 3
      %p57 = por %p55, %p56
      %p58 = scmp.ne.s32.totalorder %s50, %s53
      %p59 = scmp.eq.s32.totalorder %s14, 0
      %p60 = por %p58, %p59
      %p61 = scmp.ne.s32.totalorder %s50, %s53
      %p62 = scmp.eq.s32.totalorder %s19, 3
      %p63 = por %p61, %p62
      %p64 = scmp.ne.s32.totalorder %s53, %s54
      %p65 = scmp.eq.s32.totalorder %s19, 0
      %p66 = por %p64, %p65
      %p67 = scmp.ne.s32.totalorder %s53, %s54
      %p68 = scmp.eq.s32.totalorder %s20, 3
      %p69 = por %p67, %p68
      %p71 = scmp.ne.s32.totalorder %s54, %s70
      %p72 = scmp.eq.s32.totalorder %s20, 0
      %p73 = por %p71, %p72
      %s75 = sadd.s32 %s74, 1
      %p78 = scmp.eq.s32.totalorder %s14, 3
      %p79 = scmp.ne.s32.totalorder %s74, %s76
      %p80 = scmp.eq.s32.totalorder %s14, 0
      %p81 = por %p79, %p80
      %p82 = scmp.ne.s32.totalorder %s74, %s76
      %p83 = scmp.eq.s32.totalorder %s19, 3
      %p84 = por %p82, %p83
      %p85 = scmp.ne.s32.totalorder %s76, %s77
      %p86 = scmp.eq.s32.totalorder %s19, 0
      %p87 = por %p85, %p86
      %p88 = scmp.ne.s32.totalorder %s76, %s77
      %p89 = scmp.eq.s32.totalorder %s20, 3
      %p90 = por %p88, %p89
      %p92 = scmp.ne.s32.totalorder %s77, %s91
      %p93 = scmp.eq.s32.totalorder %s20, 0
      %p94 = por %p92, %p93
      %s96 = sadd.s32 %s95, 1
      %p99 = scmp.eq.s32.totalorder %s14, 3
      %p100 = scmp.ne.s32.totalorder %s95, %s97
      %p101 = scmp.eq.s32.totalorder %s14, 0
      %p102 = por %p100, %p101
      %p103 = scmp.ne.s32.totalorder %s95, %s97
      %p104 = scmp.eq.s32.totalorder %s19, 3
      %p105 = por %p103, %p104
      %p106 = scmp.ne.s32.totalorder %s97, %s98
      %p107 = scmp.eq.s32.totalorder %s19, 0
      %p108 = por %p106, %p107
      %p109 = scmp.ne.s32.totalorder %s97, %s98
      %p110 = scmp.eq.s32.totalorder %s20, 3
      %p111 = por %p109, %p110
      %p113 = scmp.ne.s32.totalorder %s98, %s112
      %p114 = scmp.eq.s32.totalorder %s20, 0
      %p115 = por %p113, %p114
      %s117 = sadd.s32 %s116, 1
      %p120 = scmp.eq.s32.totalorder %s14, 3
      %p121 = scmp.ne.s32.totalorder %s116, %s118
      %p122 = scmp.eq.s32.totalorder %s14, 0
      %p123 = por %p121, %p122
      %p124 = scmp.ne.s32.totalorder %s116, %s118
      %p125 = scmp.eq.s32.totalorder %s19, 3
      %p126 = por %p124, %p125
      %p127 = scmp.ne.s32.totalorder %s118, %s119
      %p128 = scmp.eq.s32.totalorder %s19, 0
      %p129 = por %p127, %p128
      %p130 = scmp.ne.s32.totalorder %s118, %s119
      %p131 = scmp.eq.s32.totalorder %s20, 3
      %p132 = por %p130, %p131
      %p134 = scmp.ne.s32.totalorder %s119, %s133
      %p135 = scmp.eq.s32.totalorder %s20, 0
      %p136 = por %p134, %p135
      %s138 = sadd.s32 %s137, 1
      %p141 = scmp.eq.s32.totalorder %s14, 3
      %p142 = scmp.ne.s32.totalorder %s137, %s139
      %p143 = scmp.eq.s32.totalorder %s14, 0
      %p144 = por %p142, %p143
      %p145 = scmp.ne.s32.totalorder %s137, %s139
      %p146 = scmp.eq.s32.totalorder %s19, 3
      %p147 = por %p145, %p146
      %p148 = scmp.ne.s32.totalorder %s139, %s140
      %p149 = scmp.eq.s32.totalorder %s19, 0
      %p150 = por %p148, %p149
      %p151 = scmp.ne.s32.totalorder %s139, %s140
      %p152 = scmp.eq.s32.totalorder %s20, 3
      %p153 = por %p151, %p152
      %p155 = scmp.ne.s32.totalorder %s140, %s154
      %p156 = scmp.eq.s32.totalorder %s20, 0
      %p157 = por %p155, %p156
      %s159 = sadd.s32 %s158, 1
      %p162 = scmp.eq.s32.totalorder %s14, 3
      %p163 = scmp.ne.s32.totalorder %s158, %s160
      %p164 = scmp.eq.s32.totalorder %s14, 0
      %p165 = por %p163, %p164
      %p166 = scmp.ne.s32.totalorder %s158, %s160
      %p167 = scmp.eq.s32.totalorder %s19, 3
      %p168 = por %p166, %p167
      %p169 = scmp.ne.s32.totalorder %s160, %s161
      %p170 = scmp.eq.s32.totalorder %s19, 0
      %p171 = por %p169, %p170
      %p172 = scmp.ne.s32.totalorder %s160, %s161
      %p173 = scmp.eq.s32.totalorder %s20, 3
      %p174 = por %p172, %p173
      %p176 = scmp.ne.s32.totalorder %s161, %s175
      %p177 = scmp.eq.s32.totalorder %s20, 0
      %p178 = por %p176, %p177
      %s180 = sadd.s32 %s179, 1
      %p183 = scmp.eq.s32.totalorder %s14, 3
      %p184 = scmp.ne.s32.totalorder %s179, %s181
      %p185 = scmp.eq.s32.totalorder %s14, 0
      %p186 = por %p184, %p185
      %p187 = scmp.ne.s32.totalorder %s179, %s181
      %p188 = scmp.eq.s32.totalorder %s19, 3
      %p189 = por %p187, %p188
      %p190 = scmp.ne.s32.totalorder %s181, %s182
      %p191 = scmp.eq.s32.totalorder %s19, 0
      %p192 = por %p190, %p191
      %p193 = scmp.ne.s32.totalorder %s181, %s182
      %p194 = scmp.eq.s32.totalorder %s20, 3
      %p195 = por %p193, %p194
      %p197 = scmp.ne.s32.totalorder %s182, %s196
      %p198 = scmp.eq.s32.totalorder %s20, 0
      %p199 = por %p197, %p198
      %s200 = ssub.s32 %s14, %s21
      %p201 = scmp.eq.s32.totalorder %s200, 0
      %s203 = sadd.s32 %s202, 1
      %s204 = scalar_select %p201, %s202, %s203
      %p207 = pneg %p201
      %p208 = scmp.eq.s32.totalorder %s14, 3
      %p209 = por %p207, %p208
      %p210 = scmp.ne.s32.totalorder %s202, %s205
      %p211 = scmp.eq.s32.totalorder %s14, 0
      %p212 = por %p210, %p211
      %p213 = scmp.ne.s32.totalorder %s202, %s205
      %p214 = scmp.eq.s32.totalorder %s19, 3
      %p215 = por %p213, %p214
      %p216 = scmp.ne.s32.totalorder %s205, %s206
      %p217 = scmp.eq.s32.totalorder %s19, 0
      %p218 = por %p216, %p217
      %p219 = scmp.ne.s32.totalorder %s205, %s206
      %p220 = scmp.eq.s32.totalorder %s20, 3
      %p221 = por %p219, %p220
      %p223 = scmp.ne.s32.totalorder %s206, %s222
      %p224 = scmp.eq.s32.totalorder %s20, 0
      %p225 = por %p223, %p224
      %p226 = scmp.le.s32.totalorder 1, %s14
      %p227 = scmp.lt.s32.totalorder %s14, 5
      %p228 = pnand %p226, %p227
      %p229 = pneg %p228
      // Predicated region
      $region9: #{link_predictor_forward.1} parent=5 // pred_check
        _
      $region10: #{link_predictor_forward.1} parent=5 // pred_check_branch
        %231 = sbr.rel (%p228) target = $region12
      $region11: #{link_predictor_forward.1} parent=5 // pred_region
        %s232 = ssub.s32 %s14, 1
        // Predicated region
        $region13: #{link_predictor_forward.1} parent=11 // pred_check
          %p233 = pneg %p87
        $region14: #{link_predictor_forward.1} parent=11 // pred_check_branch
          %235 = sbr.rel (%p233) target = $region16
        $region15: #{link_predictor_forward.1} parent=11 // pred_region
          _
        $region16: #{link_predictor_forward.1} parent=11 // pred_fallthru
          _
        // Predicated region
        $region17: #{link_predictor_forward.1} parent=11 // pred_check
          %p236 = pneg %p108
        $region18: #{link_predictor_forward.1} parent=11 // pred_check_branch
          %238 = sbr.rel (%p236) target = $region20
        $region19: #{link_predictor_forward.1} parent=11 // pred_region
          _
        $region20: #{link_predictor_forward.1} parent=11 // pred_fallthru
          _
        // Predicated region
        $region21: #{link_predictor_forward.1} parent=11 // pred_check
          %p239 = pneg %p129
        $region22: #{link_predictor_forward.1} parent=11 // pred_check_branch
          %241 = sbr.rel (%p239) target = $region24
        $region23: #{link_predictor_forward.1} parent=11 // pred_region
          _
        $region24: #{link_predictor_forward.1} parent=11 // pred_fallthru
          _
        // Predicated region
        $region25: #{link_predictor_forward.1} parent=11 // pred_check
          %p242 = pneg %p150
        $region26: #{link_predictor_forward.1} parent=11 // pred_check_branch
          %244 = sbr.rel (%p242) target = $region28
        $region27: #{link_predictor_forward.1} parent=11 // pred_region
          _
        $region28: #{link_predictor_forward.1} parent=11 // pred_fallthru
          _
        // Predicated region
        $region29: #{link_predictor_forward.1} parent=11 // pred_check
          %p245 = pneg %p171
        $region30: #{link_predictor_forward.1} parent=11 // pred_check_branch
          %247 = sbr.rel (%p245) target = $region32
        $region31: #{link_predictor_forward.1} parent=11 // pred_region
          _
        $region32: #{link_predictor_forward.1} parent=11 // pred_fallthru
          _
        // Predicated region
        $region33: #{link_predictor_forward.1} parent=11 // pred_check
          %p248 = pneg %p192
        $region34: #{link_predictor_forward.1} parent=11 // pred_check_branch
          %250 = sbr.rel (%p248) target = $region36
        $region35: #{link_predictor_forward.1} parent=11 // pred_region
          _
        $region36: #{link_predictor_forward.1} parent=11 // pred_fallthru
          _
      $region12: #{link_predictor_forward.1} parent=5 // pred_fallthru
        _
      %p251 = scmp.lt.s32.totalorder %s14, 4
      // Predicated region
      $region37: #{link_predictor_forward.1} parent=5 // pred_check
        %p252 = pneg %p251
      $region38: #{link_predictor_forward.1} parent=5 // pred_check_branch
        %254 = sbr.rel (%p252) target = $region40
      $region39: #{link_predictor_forward.1} parent=5 // pred_region
        // Predicated region
        $region41: #{link_predictor_forward.1} parent=39 // pred_check
          %p255 = pneg %p34
        $region42: #{link_predictor_forward.1} parent=39 // pred_check_branch
          %257 = sbr.rel (%p255) target = $region44
        $region43: #{link_predictor_forward.1} parent=39 // pred_region
          %s258 = smul.u32 24, %s14
          %s259 = ssub.s32 94, %s258
          %p260 = scmp.lt.s32.totalorder %s259, 24
          %s261 = scalar_select %p260, %s259, 24
          %s262 = smul.u32 128, %s261
          %p263 = scmp.lt.s32.totalorder %s258, 93
          %s264 = scalar_select %p263, %s258, 93
          %s265 = smul.addr %s264, 8
          %s266 = scalar_lea.vmem %s0, %s265
          %s267 = smul.u32 24, %s14
          %s268 = ssub.s32 94, %s267
          %p269 = scmp.lt.s32.totalorder %s268, 24
          %s270 = scalar_select %p269, %s268, 24
          %s271 = smul.u32 128, %s270
        $region44: #{link_predictor_forward.1} parent=39 // pred_fallthru
          _
        // Predicated region
        $region45: #{link_predictor_forward.1} parent=39 // pred_check
          %p272 = pneg %p60
        $region46: #{link_predictor_forward.1} parent=39 // pred_check_branch
          %274 = sbr.rel (%p272) target = $region48
        $region47: #{link_predictor_forward.1} parent=39 // pred_region
          %s275 = smul.u32 24, %s14
          %s276 = ssub.s32 94, %s275
          %p277 = scmp.lt.s32.totalorder %s276, 24
          %s278 = scalar_select %p277, %s276, 24
          %s279 = smul.u32 128, %s278
          %p280 = scmp.lt.s32.totalorder %s275, 93
          %s281 = scalar_select %p280, %s275, 93
          %s282 = smul.addr %s281, 8
          %s283 = scalar_lea.vmem %s1, %s282
          %s284 = smul.u32 24, %s14
          %s285 = ssub.s32 94, %s284
          %p286 = scmp.lt.s32.totalorder %s285, 24
          %s287 = scalar_select %p286, %s285, 24
          %s288 = smul.u32 128, %s287
        $region48: #{link_predictor_forward.1} parent=39 // pred_fallthru
          _
      $region40: #{link_predictor_forward.1} parent=5 // pred_fallthru
        _
      %p289 = scmp.le.s32.totalorder 1, %s14
      %p290 = scmp.lt.s32.totalorder %s14, 5
      %p291 = pnand %p289, %p290
      %p292 = pneg %p291
      // Predicated region
      $region49: #{link_predictor_forward.1} parent=5 // pred_check
        _
      $region50: #{link_predictor_forward.1} parent=5 // pred_check_branch
        %294 = sbr.rel (%p291) target = $region52
      $region51: #{link_predictor_forward.1} parent=5 // pred_region
        %s295 = ssub.s32 %s14, 1
        %s296 = smul.u32 24, %s19
        %s297 = ssub.s32 94, %s296
        %p298 = scmp.lt.s32.totalorder %s297, 24
        %s299 = scalar_select %p298, %s297, 24
        %s300 = smul.u32 128, %s299
        %p301 = scmp.lt.s32.totalorder %s296, 93
        %s302 = scalar_select %p301, %s296, 93
        %s303 = smul.addr %s302, 8
        %s304 = scalar_lea.vmem %s0, %s303
        %p305 = pneg %p40
        %p306 = pneg %p37
        %s307 = smul.u32 24, %s19
        %s308 = ssub.s32 94, %s307
        %p309 = scmp.lt.s32.totalorder %s308, 24
        %s310 = scalar_select %p309, %s308, 24
        %s311 = smul.u32 128, %s310
        %p312 = scmp.lt.s32.totalorder %s307, 93
        %s313 = scalar_select %p312, %s307, 93
        %s314 = smul.addr %s313, 8
        %s315 = scalar_lea.vmem %s1, %s314
        %p316 = pneg %p66
        %p317 = pneg %p63
        %p318 = pneg %p87
        %p319 = pneg %p84
        %p320 = pneg %p108
        %p321 = pneg %p105
        %p322 = pneg %p129
        %p323 = pneg %p126
        %p324 = pneg %p150
        %p325 = pneg %p147
        %p326 = pneg %p171
        %p327 = pneg %p168
        %p328 = pneg %p192
        %p329 = pneg %p189
        %p330 = pneg %p218
        %p331 = pneg %p215
        %s332 = sand.u32 %s205, 1
        %s333 = sand.u32 %s205, 1
        %s334 = smul.addr %s333, 192
        %s335 = scalar_lea.vmem [#allocation2], %s334
        %s336 = smul.u32 24, %s19
        %s337 = ssub.s32 94, %s336
        %p338 = scmp.lt.s32.totalorder %s337, 24
        %s339 = scalar_select %p338, %s337, 24
        %s340 = smul.u32 128, %s339
        %p341 = scmp.lt.s32.totalorder %s336, 93
        %s342 = scalar_select %p341, %s336, 93
        %s343 = smul.addr %s342, 8
        %s344 = scalar_lea.vmem %s0, %s343
        %s345 = smul.u32 24, %s19
        %s346 = ssub.s32 94, %s345
        %p347 = scmp.lt.s32.totalorder %s346, 24
        %s348 = scalar_select %p347, %s346, 24
        %s349 = smul.u32 128, %s348
        %s350 = smul.u32 24, %s19
        %s351 = ssub.s32 94, %s350
        %p352 = scmp.lt.s32.totalorder %s351, 24
        %s353 = scalar_select %p352, %s351, 24
        %s354 = smul.u32 128, %s353
        %p355 = scmp.lt.s32.totalorder %s350, 93
        %s356 = scalar_select %p355, %s350, 93
        %s357 = smul.addr %s356, 8
        %s358 = scalar_lea.vmem %s1, %s357
        %s359 = smul.u32 24, %s19
        %s360 = ssub.s32 94, %s359
        %p361 = scmp.lt.s32.totalorder %s360, 24
        %s362 = scalar_select %p361, %s360, 24
        %s363 = smul.u32 128, %s362
        %s364 = smul.u32 24, %s19
        %s365 = ssub.s32 94, %s364
        %p366 = scmp.lt.s32.totalorder %s365, 24
        %s367 = scalar_select %p366, %s365, 24
        %s368 = smul.u32 128, %s367
        %v369 = vld [vmem:[%s344] sm:$0xff]
        %v370 = vld [vmem:[%s344 + $0x8] sm:$0xff]
        %v371 = vld [vmem:[%s344 + $0x10] sm:$0xff]
        %v372 = vld [vmem:[%s344 + $0x18] sm:$0xff]
        %v373 = vld [vmem:[%s344 + $0x20] sm:$0xff]
        %v374 = vld [vmem:[%s344 + $0x28] sm:$0xff]
        %v375 = vld [vmem:[%s344 + $0x30] sm:$0xff]
        %v376 = vld [vmem:[%s344 + $0x38] sm:$0xff]
        %v377 = vld [vmem:[%s344 + $0x40] sm:$0xff]
        %v378 = vld [vmem:[%s344 + $0x48] sm:$0xff]
        %v379 = vld [vmem:[%s344 + $0x50] sm:$0xff]
        %v380 = vld [vmem:[%s344 + $0x58] sm:$0xff]
        %v381 = vld [vmem:[%s344 + $0x60] sm:$0xff]
        %v382 = vld [vmem:[%s344 + $0x68] sm:$0xff]
        %v383 = vld [vmem:[%s344 + $0x70] sm:$0xff]
        %v384 = vld [vmem:[%s344 + $0x78] sm:$0xff]
        %v385 = vld [vmem:[%s344 + $0x80] sm:$0xff]
        %v386 = vld [vmem:[%s344 + $0x88] sm:$0xff]
        %v387 = vld [vmem:[%s344 + $0x90] sm:$0xff]
        %v388 = vld [vmem:[%s344 + $0x98] sm:$0xff]
        %v389 = vld [vmem:[%s344 + $0xa0] sm:$0xff]
        %v390 = vld [vmem:[%s344 + $0xa8] sm:$0xff]
        %v391 = vld [vmem:[%s344 + $0xb0] sm:$0xff]
        %v392 = vld [vmem:[%s344 + $0xb8] sm:$0xff]
        %v393 = vld [vmem:[%s358] sm:$0xff]
        %v394 = vld [vmem:[%s358 + $0x8] sm:$0xff]
        %v395 = vld [vmem:[%s358 + $0x10] sm:$0xff]
        %v396 = vld [vmem:[%s358 + $0x18] sm:$0xff]
        %v397 = vld [vmem:[%s358 + $0x20] sm:$0xff]
        %v398 = vld [vmem:[%s358 + $0x28] sm:$0xff]
        %v399 = vld [vmem:[%s358 + $0x30] sm:$0xff]
        %v400 = vld [vmem:[%s358 + $0x38] sm:$0xff]
        %v401 = vld [vmem:[%s358 + $0x40] sm:$0xff]
        %v402 = vld [vmem:[%s358 + $0x48] sm:$0xff]
        %v403 = vld [vmem:[%s358 + $0x50] sm:$0xff]
        %v404 = vld [vmem:[%s358 + $0x58] sm:$0xff]
        %v405 = vld [vmem:[%s358 + $0x60] sm:$0xff]
        %v406 = vld [vmem:[%s358 + $0x68] sm:$0xff]
        %v407 = vld [vmem:[%s358 + $0x70] sm:$0xff]
        %v408 = vld [vmem:[%s358 + $0x78] sm:$0xff]
        %v409 = vld [vmem:[%s358 + $0x80] sm:$0xff]
        %v410 = vld [vmem:[%s358 + $0x88] sm:$0xff]
        %v411 = vld [vmem:[%s358 + $0x90] sm:$0xff]
        %v412 = vld [vmem:[%s358 + $0x98] sm:$0xff]
        %v413 = vld [vmem:[%s358 + $0xa0] sm:$0xff]
        %v414 = vld [vmem:[%s358 + $0xa8] sm:$0xff]
        %v415 = vld [vmem:[%s358 + $0xb0] sm:$0xff]
        %v416 = vld [vmem:[%s358 + $0xb8] sm:$0xff]
        %v417 = vmul.f32 %v369, %v393
        %v418 = vmul.f32 %v370, %v394
        %v419 = vmul.f32 %v371, %v395
        %v420 = vmul.f32 %v372, %v396
        %v421 = vmul.f32 %v373, %v397
        %v422 = vmul.f32 %v374, %v398
        %v423 = vmul.f32 %v375, %v399
        %v424 = vmul.f32 %v376, %v400
        %v425 = vmul.f32 %v377, %v401
        %v426 = vmul.f32 %v378, %v402
        %v427 = vmul.f32 %v379, %v403
        %v428 = vmul.f32 %v380, %v404
        %v429 = vmul.f32 %v381, %v405
        %v430 = vmul.f32 %v382, %v406
        %v431 = vmul.f32 %v383, %v407
        %v432 = vmul.f32 %v384, %v408
        %v433 = vmul.f32 %v385, %v409
        %v434 = vmul.f32 %v386, %v410
        %v435 = vmul.f32 %v387, %v411
        %v436 = vmul.f32 %v388, %v412
        %v437 = vmul.f32 %v389, %v413
        %v438 = vmul.f32 %v390, %v414
        %v439 = vmul.f32 %v391, %v415
        %v440 = vmul.f32 %v392, %v416
        %v441 = vld [vmem:[%s2] sm:$0xff]
        %v442 = vld [vmem:[%s2 + $0x8] sm:$0xff]
        %v443 = vld [vmem:[%s2 + $0x10] sm:$0xff]
        %v444 = vld [vmem:[%s2 + $0x18] sm:$0xff]
        %v445 = vld [vmem:[%s2 + $0x20] sm:$0xff]
        %v446 = vld [vmem:[%s2 + $0x28] sm:$0xff]
        %v447 = vld [vmem:[%s2 + $0x30] sm:$0xff]
        %v448 = vld [vmem:[%s2 + $0x38] sm:$0xff]
        %v449 = vld [vmem:[%s2 + $0x40] sm:$0xff]
        %v450 = vld [vmem:[%s2 + $0x48] sm:$0xff]
        %v451 = vld [vmem:[%s2 + $0x50] sm:$0xff]
        %v452 = vld [vmem:[%s2 + $0x58] sm:$0xff]
        %v453 = vld [vmem:[%s2 + $0x60] sm:$0xff]
        %v454 = vld [vmem:[%s2 + $0x68] sm:$0xff]
        %v455 = vld [vmem:[%s2 + $0x70] sm:$0xff]
        %v456 = vld [vmem:[%s2 + $0x78] sm:$0xff]
        %v457 = vld [vmem:[%s3] sm:$0x1]
        %v459 = vlaneseq
        %v460 = vshrl.u32 %v459, 7
        %v461 = vsub.s32 0, %v460
        %v462 = vrot.slane %v457, %v461
        %464 = vmatprep.subr.mxu0 0.0
        %465 = vmatpush1.msra.mxu0 %v441
        %466 = vmatprep.subr.mxu0 0.0
        %467 = vmatpush1.msra.mxu0 %v442
        %468 = vmatprep.subr.mxu0 0.0
        %469 = vmatpush1.msra.mxu0 %v443
        %470 = vmatprep.subr.mxu0 0.0
        %471 = vmatpush1.msra.mxu0 %v444
        %472 = vmatprep.subr.mxu0 0.0
        %473 = vmatpush1.msra.mxu0 %v445
        %474 = vmatprep.subr.mxu0 0.0
        %475 = vmatpush1.msra.mxu0 %v446
        %476 = vmatprep.subr.mxu0 0.0
        %477 = vmatpush1.msra.mxu0 %v447
        %478 = vmatprep.subr.mxu0 0.0
        %479 = vmatpush1.msra.mxu0 %v448
        %480 = vmatprep.subr.mxu0 0.0
        %481 = vmatpush1.msra.mxu0 %v449
        %482 = vmatprep.subr.mxu0 0.0
        %483 = vmatpush1.msra.mxu0 %v450
        %484 = vmatprep.subr.mxu0 0.0
        %485 = vmatpush1.msra.mxu0 %v451
        %486 = vmatprep.subr.mxu0 0.0
        %487 = vmatpush1.msra.mxu0 %v452
        %488 = vmatprep.subr.mxu0 0.0
        %489 = vmatpush1.msra.mxu0 %v453
        %490 = vmatprep.subr.mxu0 0.0
        %491 = vmatpush1.msra.mxu0 %v454
        %492 = vmatprep.subr.mxu0 0.0
        %493 = vmatpush1.msra.mxu0 %v455
        %494 = vmatprep.subr.mxu0 0.0
        %495 = vmatpush1.msra.mxu0 %v456
        %496 = vmatprep.subr.mxu0 0.0
        %497 = vmatpush1.msra.mxu0 0.0
        %498 = vmatprep.subr.mxu0 0.0
        %499 = vmatpush1.msra.mxu0 0.0
        %500 = vmatprep.subr.mxu0 0.0
        %501 = vmatpush1.msra.mxu0 0.0
        %502 = vmatprep.subr.mxu0 0.0
        %503 = vmatpush1.msra.mxu0 0.0
        %504 = vmatprep.subr.mxu0 0.0
        %505 = vmatpush1.msra.mxu0 0.0
        %506 = vmatprep.subr.mxu0 0.0
        %507 = vmatpush1.msra.mxu0 0.0
        %508 = vmatprep.subr.mxu0 0.0
        %509 = vmatpush1.msra.mxu0 0.0
        %510 = vmatprep.subr.mxu0 0.0
        %511 = vmatpush1.msra.mxu0 0.0
        %512 = vmatprep.subr.mxu0 0.0
        %513 = vmatpush1.msra.mxu0 0.0
        %514 = vmatprep.subr.mxu0 0.0
        %515 = vmatpush1.msra.mxu0 0.0
        %516 = vmatprep.subr.mxu0 0.0
        %517 = vmatpush1.msra.mxu0 0.0
        %518 = vmatprep.subr.mxu0 0.0
        %519 = vmatpush1.msra.mxu0 0.0
        %520 = vmatprep.subr.mxu0 0.0
        %521 = vmatpush1.msra.mxu0 0.0
        %522 = vmatprep.subr.mxu0 0.0
        %523 = vmatpush1.msra.mxu0 0.0
        %524 = vmatprep.subr.mxu0 0.0
        %525 = vmatpush1.msra.mxu0 0.0
        %526 = vmatprep.subr.mxu0 0.0
        %527 = vmatpush1.msra.mxu0 0.0
        %528 = vmatprep.mubr.f32.mxu0 0.0
        %529 = vmatmul.mubr.f32.gmra.mrb[0].mxu0 %v417
        %v530 = vpop.f32.mrb[0].mxu0
        %v531 = vadd.f32 %v462, %v530
        %v532 = vpop.f32.mrb[0].mxu0
        %533 = vmatprep.mubr.f32.mxu0 0.0
        %534 = vmatmul.mubr.f32.gmra.mrb[0].mxu0 %v418
        %v535 = vpop.f32.mrb[0].mxu0
        %v536 = vadd.f32 %v462, %v535
        %v537 = vpop.f32.mrb[0].mxu0
        %538 = vmatprep.mubr.f32.mxu0 0.0
        %539 = vmatmul.mubr.f32.gmra.mrb[0].mxu0 %v419
        %v540 = vpop.f32.mrb[0].mxu0
        %v541 = vadd.f32 %v462, %v540
        %v542 = vpop.f32.mrb[0].mxu0
        %543 = vmatprep.mubr.f32.mxu0 0.0
        %544 = vmatmul.mubr.f32.gmra.mrb[0].mxu0 %v420
        %v545 = vpop.f32.mrb[0].mxu0
        %v546 = vadd.f32 %v462, %v545
        %v547 = vpop.f32.mrb[0].mxu0
        %548 = vmatprep.mubr.f32.mxu0 0.0
        %549 = vmatmul.mubr.f32.gmra.mrb[0].mxu0 %v421
        %v550 = vpop.f32.mrb[0].mxu0
        %v551 = vadd.f32 %v462, %v550
        %v552 = vpop.f32.mrb[0].mxu0
        %553 = vmatprep.mubr.f32.mxu0 0.0
        %554 = vmatmul.mubr.f32.gmra.mrb[0].mxu0 %v422
        %v555 = vpop.f32.mrb[0].mxu0
        %v556 = vadd.f32 %v462, %v555
        %v557 = vpop.f32.mrb[0].mxu0
        %558 = vmatprep.mubr.f32.mxu0 0.0
        %559 = vmatmul.mubr.f32.gmra.mrb[0].mxu0 %v423
        %v560 = vpop.f32.mrb[0].mxu0
        %v561 = vadd.f32 %v462, %v560
        %v562 = vpop.f32.mrb[0].mxu0
        %563 = vmatprep.mubr.f32.mxu0 0.0
        %564 = vmatmul.mubr.f32.gmra.mrb[0].mxu0 %v424
        %v565 = vpop.f32.mrb[0].mxu0
        %v566 = vadd.f32 %v462, %v565
        %v567 = vpop.f32.mrb[0].mxu0
        %568 = vmatprep.mubr.f32.mxu0 0.0
        %569 = vmatmul.mubr.f32.gmra.mrb[0].mxu0 %v425
        %v570 = vpop.f32.mrb[0].mxu0
        %v571 = vadd.f32 %v462, %v570
        %v572 = vpop.f32.mrb[0].mxu0
        %573 = vmatprep.mubr.f32.mxu0 0.0
        %574 = vmatmul.mubr.f32.gmra.mrb[0].mxu0 %v426
        %v575 = vpop.f32.mrb[0].mxu0
        %v576 = vadd.f32 %v462, %v575
        %v577 = vpop.f32.mrb[0].mxu0
        %578 = vmatprep.mubr.f32.mxu0 0.0
        %579 = vmatmul.mubr.f32.gmra.mrb[0].mxu0 %v427
        %v580 = vpop.f32.mrb[0].mxu0
        %v581 = vadd.f32 %v462, %v580
        %v582 = vpop.f32.mrb[0].mxu0
        %583 = vmatprep.mubr.f32.mxu0 0.0
        %584 = vmatmul.mubr.f32.gmra.mrb[0].mxu0 %v428
        %v585 = vpop.f32.mrb[0].mxu0
        %v586 = vadd.f32 %v462, %v585
        %v587 = vpop.f32.mrb[0].mxu0
        %588 = vmatprep.mubr.f32.mxu0 0.0
        %589 = vmatmul.mubr.f32.gmra.mrb[0].mxu0 %v429
        %v590 = vpop.f32.mrb[0].mxu0
        %v591 = vadd.f32 %v462, %v590
        %v592 = vpop.f32.mrb[0].mxu0
        %593 = vmatprep.mubr.f32.mxu0 0.0
        %594 = vmatmul.mubr.f32.gmra.mrb[0].mxu0 %v430
        %v595 = vpop.f32.mrb[0].mxu0
        %v596 = vadd.f32 %v462, %v595
        %v597 = vpop.f32.mrb[0].mxu0
        %598 = vmatprep.mubr.f32.mxu0 0.0
        %599 = vmatmul.mubr.f32.gmra.mrb[0].mxu0 %v431
        %v600 = vpop.f32.mrb[0].mxu0
        %v601 = vadd.f32 %v462, %v600
        %v602 = vpop.f32.mrb[0].mxu0
        %603 = vmatprep.mubr.f32.mxu0 0.0
        %604 = vmatmul.mubr.f32.gmra.mrb[0].mxu0 %v432
        %v605 = vpop.f32.mrb[0].mxu0
        %v606 = vadd.f32 %v462, %v605
        %v607 = vpop.f32.mrb[0].mxu0
        %608 = vmatprep.mubr.f32.mxu0 0.0
        %609 = vmatmul.mubr.f32.gmra.mrb[0].mxu0 %v433
        %v610 = vpop.f32.mrb[0].mxu0
        %v611 = vadd.f32 %v462, %v610
        %v612 = vpop.f32.mrb[0].mxu0
        %613 = vmatprep.mubr.f32.mxu0 0.0
        %614 = vmatmul.mubr.f32.gmra.mrb[0].mxu0 %v434
        %v615 = vpop.f32.mrb[0].mxu0
        %v616 = vadd.f32 %v462, %v615
        %v617 = vpop.f32.mrb[0].mxu0
        %618 = vmatprep.mubr.f32.mxu0 0.0
        %619 = vmatmul.mubr.f32.gmra.mrb[0].mxu0 %v435
        %v620 = vpop.f32.mrb[0].mxu0
        %v621 = vadd.f32 %v462, %v620
        %v622 = vpop.f32.mrb[0].mxu0
        %623 = vmatprep.mubr.f32.mxu0 0.0
        %624 = vmatmul.mubr.f32.gmra.mrb[0].mxu0 %v436
        %v625 = vpop.f32.mrb[0].mxu0
        %v626 = vadd.f32 %v462, %v625
        %v627 = vpop.f32.mrb[0].mxu0
        %628 = vmatprep.mubr.f32.mxu0 0.0
        %629 = vmatmul.mubr.f32.gmra.mrb[0].mxu0 %v437
        %v630 = vpop.f32.mrb[0].mxu0
        %v631 = vadd.f32 %v462, %v630
        %v632 = vpop.f32.mrb[0].mxu0
        %633 = vmatprep.mubr.f32.mxu0 0.0
        %634 = vmatmul.mubr.f32.gmra.mrb[0].mxu0 %v438
        %v635 = vpop.f32.mrb[0].mxu0
        %v636 = vadd.f32 %v462, %v635
        %v637 = vpop.f32.mrb[0].mxu0
        %638 = vmatprep.mubr.f32.mxu0 0.0
        %639 = vmatmul.mubr.f32.gmra.mrb[0].mxu0 %v439
        %v640 = vpop.f32.mrb[0].mxu0
        %v641 = vadd.f32 %v462, %v640
        %v642 = vpop.f32.mrb[0].mxu0
        %643 = vmatprep.mubr.f32.mxu0 0.0
        %644 = vmatmul.mubr.f32.gmra.mrb[0].mxu0 %v440
        %v645 = vpop.f32.mrb[0].mxu0
        %v646 = vadd.f32 %v462, %v645
        %v647 = vpop.f32.mrb[0].mxu0
        %648 = vdwg.mxu0
        %v649 = vmax.f32 %v531, 0.0
        %v650 = vmax.f32 %v536, 0.0
        %v651 = vmax.f32 %v541, 0.0
        %v652 = vmax.f32 %v546, 0.0
        %v653 = vmax.f32 %v551, 0.0
        %v654 = vmax.f32 %v556, 0.0
        %v655 = vmax.f32 %v561, 0.0
        %v656 = vmax.f32 %v566, 0.0
        %v657 = vmax.f32 %v571, 0.0
        %v658 = vmax.f32 %v576, 0.0
        %v659 = vmax.f32 %v581, 0.0
        %v660 = vmax.f32 %v586, 0.0
        %v661 = vmax.f32 %v591, 0.0
        %v662 = vmax.f32 %v596, 0.0
        %v663 = vmax.f32 %v601, 0.0
        %v664 = vmax.f32 %v606, 0.0
        %v665 = vmax.f32 %v611, 0.0
        %v666 = vmax.f32 %v616, 0.0
        %v667 = vmax.f32 %v621, 0.0
        %v668 = vmax.f32 %v626, 0.0
        %v669 = vmax.f32 %v631, 0.0
        %v670 = vmax.f32 %v636, 0.0
        %v671 = vmax.f32 %v641, 0.0
        %v672 = vmax.f32 %v646, 0.0
        %v673 = vld [vmem:[%s4] sm:$0xff]
        %v674 = vld [vmem:[%s4 + $0x8] sm:$0xff]
        %v675 = vld [vmem:[%s4 + $0x10] sm:$0xff]
        %v676 = vld [vmem:[%s4 + $0x18] sm:$0xff]
        %v677 = vld [vmem:[%s4 + $0x20] sm:$0xff]
        %v678 = vld [vmem:[%s4 + $0x28] sm:$0xff]
        %v679 = vld [vmem:[%s4 + $0x30] sm:$0xff]
        %v680 = vld [vmem:[%s4 + $0x38] sm:$0xff]
        %v681 = vld [vmem:[%s4 + $0x40] sm:$0xff]
        %v682 = vld [vmem:[%s4 + $0x48] sm:$0xff]
        %v683 = vld [vmem:[%s4 + $0x50] sm:$0xff]
        %v684 = vld [vmem:[%s4 + $0x58] sm:$0xff]
        %v685 = vld [vmem:[%s4 + $0x60] sm:$0xff]
        %v686 = vld [vmem:[%s4 + $0x68] sm:$0xff]
        %v687 = vld [vmem:[%s4 + $0x70] sm:$0xff]
        %v688 = vld [vmem:[%s4 + $0x78] sm:$0xff]
        %v689 = vld [vmem:[%s5] sm:$0x1]
        %v691 = vlaneseq
        %v692 = vshrl.u32 %v691, 7
        %v693 = vsub.s32 0, %v692
        %v694 = vrot.slane %v689, %v693
        %696 = vmatprep.subr.mxu0 0.0
        %697 = vmatpush1.msra.mxu0 %v673
        %698 = vmatprep.subr.mxu0 0.0
        %699 = vmatpush1.msra.mxu0 %v674
        %700 = vmatprep.subr.mxu0 0.0
        %701 = vmatpush1.msra.mxu0 %v675
        %702 = vmatprep.subr.mxu0 0.0
        %703 = vmatpush1.msra.mxu0 %v676
        %704 = vmatprep.subr.mxu0 0.0
        %705 = vmatpush1.msra.mxu0 %v677
        %706 = vmatprep.subr.mxu0 0.0
        %707 = vmatpush1.msra.mxu0 %v678
        %708 = vmatprep.subr.mxu0 0.0
        %709 = vmatpush1.msra.mxu0 %v679
        %710 = vmatprep.subr.mxu0 0.0
        %711 = vmatpush1.msra.mxu0 %v680
        %712 = vmatprep.subr.mxu0 0.0
        %713 = vmatpush1.msra.mxu0 %v681
        %714 = vmatprep.subr.mxu0 0.0
        %715 = vmatpush1.msra.mxu0 %v682
        %716 = vmatprep.subr.mxu0 0.0
        %717 = vmatpush1.msra.mxu0 %v683
        %718 = vmatprep.subr.mxu0 0.0
        %719 = vmatpush1.msra.mxu0 %v684
        %720 = vmatprep.subr.mxu0 0.0
        %721 = vmatpush1.msra.mxu0 %v685
        %722 = vmatprep.subr.mxu0 0.0
        %723 = vmatpush1.msra.mxu0 %v686
        %724 = vmatprep.subr.mxu0 0.0
        %725 = vmatpush1.msra.mxu0 %v687
        %726 = vmatprep.subr.mxu0 0.0
        %727 = vmatpush1.msra.mxu0 %v688
        %728 = vmatprep.subr.mxu0 0.0
        %729 = vmatpush1.msra.mxu0 0.0
        %730 = vmatprep.subr.mxu0 0.0
        %731 = vmatpush1.msra.mxu0 0.0
        %732 = vmatprep.subr.mxu0 0.0
        %733 = vmatpush1.msra.mxu0 0.0
        %734 = vmatprep.subr.mxu0 0.0
        %735 = vmatpush1.msra.mxu0 0.0
        %736 = vmatprep.subr.mxu0 0.0
        %737 = vmatpush1.msra.mxu0 0.0
        %738 = vmatprep.subr.mxu0 0.0
        %739 = vmatpush1.msra.mxu0 0.0
        %740 = vmatprep.subr.mxu0 0.0
        %741 = vmatpush1.msra.mxu0 0.0
        %742 = vmatprep.subr.mxu0 0.0
        %743 = vmatpush1.msra.mxu0 0.0
        %744 = vmatprep.subr.mxu0 0.0
        %745 = vmatpush1.msra.mxu0 0.0
        %746 = vmatprep.subr.mxu0 0.0
        %747 = vmatpush1.msra.mxu0 0.0
        %748 = vmatprep.subr.mxu0 0.0
        %749 = vmatpush1.msra.mxu0 0.0
        %750 = vmatprep.subr.mxu0 0.0
        %751 = vmatpush1.msra.mxu0 0.0
        %752 = vmatprep.subr.mxu0 0.0
        %753 = vmatpush1.msra.mxu0 0.0
        %754 = vmatprep.subr.mxu0 0.0
        %755 = vmatpush1.msra.mxu0 0.0
        %756 = vmatprep.subr.mxu0 0.0
        %757 = vmatpush1.msra.mxu0 0.0
        %758 = vmatprep.subr.mxu0 0.0
        %759 = vmatpush1.msra.mxu0 0.0
        %760 = vmatprep.mubr.f32.mxu0 0.0
        %761 = vmatmul.mubr.f32.gmra.mrb[0].mxu0 %v649
        %v762 = vpop.f32.mrb[0].mxu0
        %v763 = vadd.f32 %v694, %v762
        %v764 = vpop.f32.mrb[0].mxu0
        %765 = vmatprep.mubr.f32.mxu0 0.0
        %766 = vmatmul.mubr.f32.gmra.mrb[0].mxu0 %v650
        %v767 = vpop.f32.mrb[0].mxu0
        %v768 = vadd.f32 %v694, %v767
        %v769 = vpop.f32.mrb[0].mxu0
        %770 = vmatprep.mubr.f32.mxu0 0.0
        %771 = vmatmul.mubr.f32.gmra.mrb[0].mxu0 %v651
        %v772 = vpop.f32.mrb[0].mxu0
        %v773 = vadd.f32 %v694, %v772
        %v774 = vpop.f32.mrb[0].mxu0
        %775 = vmatprep.mubr.f32.mxu0 0.0
        %776 = vmatmul.mubr.f32.gmra.mrb[0].mxu0 %v652
        %v777 = vpop.f32.mrb[0].mxu0
        %v778 = vadd.f32 %v694, %v777
        %v779 = vpop.f32.mrb[0].mxu0
        %780 = vmatprep.mubr.f32.mxu0 0.0
        %781 = vmatmul.mubr.f32.gmra.mrb[0].mxu0 %v653
        %v782 = vpop.f32.mrb[0].mxu0
        %v783 = vadd.f32 %v694, %v782
        %v784 = vpop.f32.mrb[0].mxu0
        %785 = vmatprep.mubr.f32.mxu0 0.0
        %786 = vmatmul.mubr.f32.gmra.mrb[0].mxu0 %v654
        %v787 = vpop.f32.mrb[0].mxu0
        %v788 = vadd.f32 %v694, %v787
        %v789 = vpop.f32.mrb[0].mxu0
        %790 = vmatprep.mubr.f32.mxu0 0.0
        %791 = vmatmul.mubr.f32.gmra.mrb[0].mxu0 %v655
        %v792 = vpop.f32.mrb[0].mxu0
        %v793 = vadd.f32 %v694, %v792
        %v794 = vpop.f32.mrb[0].mxu0
        %795 = vmatprep.mubr.f32.mxu0 0.0
        %796 = vmatmul.mubr.f32.gmra.mrb[0].mxu0 %v656
        %v797 = vpop.f32.mrb[0].mxu0
        %v798 = vadd.f32 %v694, %v797
        %v799 = vpop.f32.mrb[0].mxu0
        %800 = vmatprep.mubr.f32.mxu0 0.0
        %801 = vmatmul.mubr.f32.gmra.mrb[0].mxu0 %v657
        %v802 = vpop.f32.mrb[0].mxu0
        %v803 = vadd.f32 %v694, %v802
        %v804 = vpop.f32.mrb[0].mxu0
        %805 = vmatprep.mubr.f32.mxu0 0.0
        %806 = vmatmul.mubr.f32.gmra.mrb[0].mxu0 %v658
        %v807 = vpop.f32.mrb[0].mxu0
        %v808 = vadd.f32 %v694, %v807
        %v809 = vpop.f32.mrb[0].mxu0
        %810 = vmatprep.mubr.f32.mxu0 0.0
        %811 = vmatmul.mubr.f32.gmra.mrb[0].mxu0 %v659
        %v812 = vpop.f32.mrb[0].mxu0
        %v813 = vadd.f32 %v694, %v812
        %v814 = vpop.f32.mrb[0].mxu0
        %815 = vmatprep.mubr.f32.mxu0 0.0
        %816 = vmatmul.mubr.f32.gmra.mrb[0].mxu0 %v660
        %v817 = vpop.f32.mrb[0].mxu0
        %v818 = vadd.f32 %v694, %v817
        %v819 = vpop.f32.mrb[0].mxu0
        %820 = vmatprep.mubr.f32.mxu0 0.0
        %821 = vmatmul.mubr.f32.gmra.mrb[0].mxu0 %v661
        %v822 = vpop.f32.mrb[0].mxu0
        %v823 = vadd.f32 %v694, %v822
        %v824 = vpop.f32.mrb[0].mxu0
        %825 = vmatprep.mubr.f32.mxu0 0.0
        %826 = vmatmul.mubr.f32.gmra.mrb[0].mxu0 %v662
        %v827 = vpop.f32.mrb[0].mxu0
        %v828 = vadd.f32 %v694, %v827
        %v829 = vpop.f32.mrb[0].mxu0
        %830 = vmatprep.mubr.f32.mxu0 0.0
        %831 = vmatmul.mubr.f32.gmra.mrb[0].mxu0 %v663
        %v832 = vpop.f32.mrb[0].mxu0
        %v833 = vadd.f32 %v694, %v832
        %v834 = vpop.f32.mrb[0].mxu0
        %835 = vmatprep.mubr.f32.mxu0 0.0
        %836 = vmatmul.mubr.f32.gmra.mrb[0].mxu0 %v664
        %v837 = vpop.f32.mrb[0].mxu0
        %v838 = vadd.f32 %v694, %v837
        %v839 = vpop.f32.mrb[0].mxu0
        %840 = vmatprep.mubr.f32.mxu0 0.0
        %841 = vmatmul.mubr.f32.gmra.mrb[0].mxu0 %v665
        %v842 = vpop.f32.mrb[0].mxu0
        %v843 = vadd.f32 %v694, %v842
        %v844 = vpop.f32.mrb[0].mxu0
        %845 = vmatprep.mubr.f32.mxu0 0.0
        %846 = vmatmul.mubr.f32.gmra.mrb[0].mxu0 %v666
        %v847 = vpop.f32.mrb[0].mxu0
        %v848 = vadd.f32 %v694, %v847
        %v849 = vpop.f32.mrb[0].mxu0
        %850 = vmatprep.mubr.f32.mxu0 0.0
        %851 = vmatmul.mubr.f32.gmra.mrb[0].mxu0 %v667
        %v852 = vpop.f32.mrb[0].mxu0
        %v853 = vadd.f32 %v694, %v852
        %v854 = vpop.f32.mrb[0].mxu0
        %855 = vmatprep.mubr.f32.mxu0 0.0
        %856 = vmatmul.mubr.f32.gmra.mrb[0].mxu0 %v668
        %v857 = vpop.f32.mrb[0].mxu0
        %v858 = vadd.f32 %v694, %v857
        %v859 = vpop.f32.mrb[0].mxu0
        %860 = vmatprep.mubr.f32.mxu0 0.0
        %861 = vmatmul.mubr.f32.gmra.mrb[0].mxu0 %v669
        %v862 = vpop.f32.mrb[0].mxu0
        %v863 = vadd.f32 %v694, %v862
        %v864 = vpop.f32.mrb[0].mxu0
        %865 = vmatprep.mubr.f32.mxu0 0.0
        %866 = vmatmul.mubr.f32.gmra.mrb[0].mxu0 %v670
        %v867 = vpop.f32.mrb[0].mxu0
        %v868 = vadd.f32 %v694, %v867
        %v869 = vpop.f32.mrb[0].mxu0
        %870 = vmatprep.mubr.f32.mxu0 0.0
        %871 = vmatmul.mubr.f32.gmra.mrb[0].mxu0 %v671
        %v872 = vpop.f32.mrb[0].mxu0
        %v873 = vadd.f32 %v694, %v872
        %v874 = vpop.f32.mrb[0].mxu0
        %875 = vmatprep.mubr.f32.mxu0 0.0
        %876 = vmatmul.mubr.f32.gmra.mrb[0].mxu0 %v672
        %v877 = vpop.f32.mrb[0].mxu0
        %v878 = vadd.f32 %v694, %v877
        %v879 = vpop.f32.mrb[0].mxu0
        %880 = vdwg.mxu0
        %v881 = vmax.f32 %v763, 0.0
        %v882 = vmax.f32 %v768, 0.0
        %v883 = vmax.f32 %v773, 0.0
        %v884 = vmax.f32 %v778, 0.0
        %v885 = vmax.f32 %v783, 0.0
        %v886 = vmax.f32 %v788, 0.0
        %v887 = vmax.f32 %v793, 0.0
        %v888 = vmax.f32 %v798, 0.0
        %v889 = vmax.f32 %v803, 0.0
        %v890 = vmax.f32 %v808, 0.0
        %v891 = vmax.f32 %v813, 0.0
        %v892 = vmax.f32 %v818, 0.0
        %v893 = vmax.f32 %v823, 0.0
        %v894 = vmax.f32 %v828, 0.0
        %v895 = vmax.f32 %v833, 0.0
        %v896 = vmax.f32 %v838, 0.0
        %v897 = vmax.f32 %v843, 0.0
        %v898 = vmax.f32 %v848, 0.0
        %v899 = vmax.f32 %v853, 0.0
        %v900 = vmax.f32 %v858, 0.0
        %v901 = vmax.f32 %v863, 0.0
        %v902 = vmax.f32 %v868, 0.0
        %v903 = vmax.f32 %v873, 0.0
        %v904 = vmax.f32 %v878, 0.0
        %v905 = vld [vmem:[%s6] sm:$0xff]
        %v906 = vld [vmem:[%s6 + $0x8] sm:$0xff]
        %v907 = vld [vmem:[%s6 + $0x10] sm:$0xff]
        %v908 = vld [vmem:[%s6 + $0x18] sm:$0xff]
        %v909 = vld [vmem:[%s6 + $0x20] sm:$0xff]
        %v910 = vld [vmem:[%s6 + $0x28] sm:$0xff]
        %v911 = vld [vmem:[%s6 + $0x30] sm:$0xff]
        %v912 = vld [vmem:[%s6 + $0x38] sm:$0xff]
        %v913 = vld [vmem:[%s6 + $0x40] sm:$0xff]
        %v914 = vld [vmem:[%s6 + $0x48] sm:$0xff]
        %v915 = vld [vmem:[%s6 + $0x50] sm:$0xff]
        %v916 = vld [vmem:[%s6 + $0x58] sm:$0xff]
        %v917 = vld [vmem:[%s6 + $0x60] sm:$0xff]
        %v918 = vld [vmem:[%s6 + $0x68] sm:$0xff]
        %v919 = vld [vmem:[%s6 + $0x70] sm:$0xff]
        %v920 = vld [vmem:[%s6 + $0x78] sm:$0xff]
        %v921 = vld [vmem:[%s7] sm:$0x1]
        %v923 = vlaneseq
        %v924 = vshrl.u32 %v923, 7
        %v925 = vsub.s32 0, %v924
        %v926 = vrot.slane %v921, %v925
        %928 = vmatprep.subr.mxu0 0.0
        %929 = vmatpush1.msra.mxu0 %v905
        %930 = vmatprep.subr.mxu0 0.0
        %931 = vmatpush1.msra.mxu0 %v906
        %932 = vmatprep.subr.mxu0 0.0
        %933 = vmatpush1.msra.mxu0 %v907
        %934 = vmatprep.subr.mxu0 0.0
        %935 = vmatpush1.msra.mxu0 %v908
        %936 = vmatprep.subr.mxu0 0.0
        %937 = vmatpush1.msra.mxu0 %v909
        %938 = vmatprep.subr.mxu0 0.0
        %939 = vmatpush1.msra.mxu0 %v910
        %940 = vmatprep.subr.mxu0 0.0
        %941 = vmatpush1.msra.mxu0 %v911
        %942 = vmatprep.subr.mxu0 0.0
        %943 = vmatpush1.msra.mxu0 %v912
        %944 = vmatprep.subr.mxu0 0.0
        %945 = vmatpush1.msra.mxu0 %v913
        %946 = vmatprep.subr.mxu0 0.0
        %947 = vmatpush1.msra.mxu0 %v914
        %948 = vmatprep.subr.mxu0 0.0
        %949 = vmatpush1.msra.mxu0 %v915
        %950 = vmatprep.subr.mxu0 0.0
        %951 = vmatpush1.msra.mxu0 %v916
        %952 = vmatprep.subr.mxu0 0.0
        %953 = vmatpush1.msra.mxu0 %v917
        %954 = vmatprep.subr.mxu0 0.0
        %955 = vmatpush1.msra.mxu0 %v918
        %956 = vmatprep.subr.mxu0 0.0
        %957 = vmatpush1.msra.mxu0 %v919
        %958 = vmatprep.subr.mxu0 0.0
        %959 = vmatpush1.msra.mxu0 %v920
        %960 = vmatprep.subr.mxu0 0.0
        %961 = vmatpush1.msra.mxu0 0.0
        %962 = vmatprep.subr.mxu0 0.0
        %963 = vmatpush1.msra.mxu0 0.0
        %964 = vmatprep.subr.mxu0 0.0
        %965 = vmatpush1.msra.mxu0 0.0
        %966 = vmatprep.subr.mxu0 0.0
        %967 = vmatpush1.msra.mxu0 0.0
        %968 = vmatprep.subr.mxu0 0.0
        %969 = vmatpush1.msra.mxu0 0.0
        %970 = vmatprep.subr.mxu0 0.0
        %971 = vmatpush1.msra.mxu0 0.0
        %972 = vmatprep.subr.mxu0 0.0
        %973 = vmatpush1.msra.mxu0 0.0
        %974 = vmatprep.subr.mxu0 0.0
        %975 = vmatpush1.msra.mxu0 0.0
        %976 = vmatprep.subr.mxu0 0.0
        %977 = vmatpush1.msra.mxu0 0.0
        %978 = vmatprep.subr.mxu0 0.0
        %979 = vmatpush1.msra.mxu0 0.0
        %980 = vmatprep.subr.mxu0 0.0
        %981 = vmatpush1.msra.mxu0 0.0
        %982 = vmatprep.subr.mxu0 0.0
        %983 = vmatpush1.msra.mxu0 0.0
        %984 = vmatprep.subr.mxu0 0.0
        %985 = vmatpush1.msra.mxu0 0.0
        %986 = vmatprep.subr.mxu0 0.0
        %987 = vmatpush1.msra.mxu0 0.0
        %988 = vmatprep.subr.mxu0 0.0
        %989 = vmatpush1.msra.mxu0 0.0
        %990 = vmatprep.subr.mxu0 0.0
        %991 = vmatpush1.msra.mxu0 0.0
        %992 = vmatprep.mubr.f32.mxu0 0.0
        %993 = vmatmul.mubr.f32.gmra.mrb[0].mxu0 %v881
        %v994 = vpop.f32.mrb[0].mxu0
        %v995 = vadd.f32 %v926, %v994
        %v996 = vpop.f32.mrb[0].mxu0
        %997 = vmatprep.mubr.f32.mxu0 0.0
        %998 = vmatmul.mubr.f32.gmra.mrb[0].mxu0 %v882
        %v999 = vpop.f32.mrb[0].mxu0
        %v1000 = vadd.f32 %v926, %v999
        %v1001 = vpop.f32.mrb[0].mxu0
        %1002 = vmatprep.mubr.f32.mxu0 0.0
        %1003 = vmatmul.mubr.f32.gmra.mrb[0].mxu0 %v883
        %v1004 = vpop.f32.mrb[0].mxu0
        %v1005 = vadd.f32 %v926, %v1004
        %v1006 = vpop.f32.mrb[0].mxu0
        %1007 = vmatprep.mubr.f32.mxu0 0.0
        %1008 = vmatmul.mubr.f32.gmra.mrb[0].mxu0 %v884
        %v1009 = vpop.f32.mrb[0].mxu0
        %v1010 = vadd.f32 %v926, %v1009
        %v1011 = vpop.f32.mrb[0].mxu0
        %1012 = vmatprep.mubr.f32.mxu0 0.0
        %1013 = vmatmul.mubr.f32.gmra.mrb[0].mxu0 %v885
        %v1014 = vpop.f32.mrb[0].mxu0
        %v1015 = vadd.f32 %v926, %v1014
        %v1016 = vpop.f32.mrb[0].mxu0
        %1017 = vmatprep.mubr.f32.mxu0 0.0
        %1018 = vmatmul.mubr.f32.gmra.mrb[0].mxu0 %v886
        %v1019 = vpop.f32.mrb[0].mxu0
        %v1020 = vadd.f32 %v926, %v1019
        %v1021 = vpop.f32.mrb[0].mxu0
        %1022 = vmatprep.mubr.f32.mxu0 0.0
        %1023 = vmatmul.mubr.f32.gmra.mrb[0].mxu0 %v887
        %v1024 = vpop.f32.mrb[0].mxu0
        %v1025 = vadd.f32 %v926, %v1024
        %v1026 = vpop.f32.mrb[0].mxu0
        %1027 = vmatprep.mubr.f32.mxu0 0.0
        %1028 = vmatmul.mubr.f32.gmra.mrb[0].mxu0 %v888
        %v1029 = vpop.f32.mrb[0].mxu0
        %v1030 = vadd.f32 %v926, %v1029
        %v1031 = vpop.f32.mrb[0].mxu0
        %1032 = vmatprep.mubr.f32.mxu0 0.0
        %1033 = vmatmul.mubr.f32.gmra.mrb[0].mxu0 %v889
        %v1034 = vpop.f32.mrb[0].mxu0
        %v1035 = vadd.f32 %v926, %v1034
        %v1036 = vpop.f32.mrb[0].mxu0
        %1037 = vmatprep.mubr.f32.mxu0 0.0
        %1038 = vmatmul.mubr.f32.gmra.mrb[0].mxu0 %v890
        %v1039 = vpop.f32.mrb[0].mxu0
        %v1040 = vadd.f32 %v926, %v1039
        %v1041 = vpop.f32.mrb[0].mxu0
        %1042 = vmatprep.mubr.f32.mxu0 0.0
        %1043 = vmatmul.mubr.f32.gmra.mrb[0].mxu0 %v891
        %v1044 = vpop.f32.mrb[0].mxu0
        %v1045 = vadd.f32 %v926, %v1044
        %v1046 = vpop.f32.mrb[0].mxu0
        %1047 = vmatprep.mubr.f32.mxu0 0.0
        %1048 = vmatmul.mubr.f32.gmra.mrb[0].mxu0 %v892
        %v1049 = vpop.f32.mrb[0].mxu0
        %v1050 = vadd.f32 %v926, %v1049
        %v1051 = vpop.f32.mrb[0].mxu0
        %1052 = vmatprep.mubr.f32.mxu0 0.0
        %1053 = vmatmul.mubr.f32.gmra.mrb[0].mxu0 %v893
        %v1054 = vpop.f32.mrb[0].mxu0
        %v1055 = vadd.f32 %v926, %v1054
        %v1056 = vpop.f32.mrb[0].mxu0
        %1057 = vmatprep.mubr.f32.mxu0 0.0
        %1058 = vmatmul.mubr.f32.gmra.mrb[0].mxu0 %v894
        %v1059 = vpop.f32.mrb[0].mxu0
        %v1060 = vadd.f32 %v926, %v1059
        %v1061 = vpop.f32.mrb[0].mxu0
        %1062 = vmatprep.mubr.f32.mxu0 0.0
        %1063 = vmatmul.mubr.f32.gmra.mrb[0].mxu0 %v895
        %v1064 = vpop.f32.mrb[0].mxu0
        %v1065 = vadd.f32 %v926, %v1064
        %v1066 = vpop.f32.mrb[0].mxu0
        %1067 = vmatprep.mubr.f32.mxu0 0.0
        %1068 = vmatmul.mubr.f32.gmra.mrb[0].mxu0 %v896
        %v1069 = vpop.f32.mrb[0].mxu0
        %v1070 = vadd.f32 %v926, %v1069
        %v1071 = vpop.f32.mrb[0].mxu0
        %1072 = vmatprep.mubr.f32.mxu0 0.0
        %1073 = vmatmul.mubr.f32.gmra.mrb[0].mxu0 %v897
        %v1074 = vpop.f32.mrb[0].mxu0
        %v1075 = vadd.f32 %v926, %v1074
        %v1076 = vpop.f32.mrb[0].mxu0
        %1077 = vmatprep.mubr.f32.mxu0 0.0
        %1078 = vmatmul.mubr.f32.gmra.mrb[0].mxu0 %v898
        %v1079 = vpop.f32.mrb[0].mxu0
        %v1080 = vadd.f32 %v926, %v1079
        %v1081 = vpop.f32.mrb[0].mxu0
        %1082 = vmatprep.mubr.f32.mxu0 0.0
        %1083 = vmatmul.mubr.f32.gmra.mrb[0].mxu0 %v899
        %v1084 = vpop.f32.mrb[0].mxu0
        %v1085 = vadd.f32 %v926, %v1084
        %v1086 = vpop.f32.mrb[0].mxu0
        %1087 = vmatprep.mubr.f32.mxu0 0.0
        %1088 = vmatmul.mubr.f32.gmra.mrb[0].mxu0 %v900
        %v1089 = vpop.f32.mrb[0].mxu0
        %v1090 = vadd.f32 %v926, %v1089
        %v1091 = vpop.f32.mrb[0].mxu0
        %1092 = vmatprep.mubr.f32.mxu0 0.0
        %1093 = vmatmul.mubr.f32.gmra.mrb[0].mxu0 %v901
        %v1094 = vpop.f32.mrb[0].mxu0
        %v1095 = vadd.f32 %v926, %v1094
        %v1096 = vpop.f32.mrb[0].mxu0
        %1097 = vmatprep.mubr.f32.mxu0 0.0
        %1098 = vmatmul.mubr.f32.gmra.mrb[0].mxu0 %v902
        %v1099 = vpop.f32.mrb[0].mxu0
        %v1100 = vadd.f32 %v926, %v1099
        %v1101 = vpop.f32.mrb[0].mxu0
        %1102 = vmatprep.mubr.f32.mxu0 0.0
        %1103 = vmatmul.mubr.f32.gmra.mrb[0].mxu0 %v903
        %v1104 = vpop.f32.mrb[0].mxu0
        %v1105 = vadd.f32 %v926, %v1104
        %v1106 = vpop.f32.mrb[0].mxu0
        %1107 = vmatprep.mubr.f32.mxu0 0.0
        %1108 = vmatmul.mubr.f32.gmra.mrb[0].mxu0 %v904
        %v1109 = vpop.f32.mrb[0].mxu0
        %v1110 = vadd.f32 %v926, %v1109
        %v1111 = vpop.f32.mrb[0].mxu0
        %1112 = vdwg.mxu0
        %v1113 = vxor.u32 %v995, 2147483648
        %v1114 = vxor.u32 %v1000, 2147483648
        %v1115 = vxor.u32 %v1005, 2147483648
        %v1116 = vxor.u32 %v1010, 2147483648
        %v1117 = vxor.u32 %v1015, 2147483648
        %v1118 = vxor.u32 %v1020, 2147483648
        %v1119 = vxor.u32 %v1025, 2147483648
        %v1120 = vxor.u32 %v1030, 2147483648
        %v1121 = vxor.u32 %v1035, 2147483648
        %v1122 = vxor.u32 %v1040, 2147483648
        %v1123 = vxor.u32 %v1045, 2147483648
        %v1124 = vxor.u32 %v1050, 2147483648
        %v1125 = vxor.u32 %v1055, 2147483648
        %v1126 = vxor.u32 %v1060, 2147483648
        %v1127 = vxor.u32 %v1065, 2147483648
        %v1128 = vxor.u32 %v1070, 2147483648
        %v1129 = vxor.u32 %v1075, 2147483648
        %v1130 = vxor.u32 %v1080, 2147483648
        %v1131 = vxor.u32 %v1085, 2147483648
        %v1132 = vxor.u32 %v1090, 2147483648
        %v1133 = vxor.u32 %v1095, 2147483648
        %v1134 = vxor.u32 %v1100, 2147483648
        %v1135 = vxor.u32 %v1105, 2147483648
        %v1136 = vxor.u32 %v1110, 2147483648
        %v1137 = vmul.f32 %v1113, 1.442695
        %v1138 = vpow.pop %v1137
        %v1139 = vmul.f32 %v1114, 1.442695
        %v1140 = vpow.pop %v1139
        %v1141 = vmul.f32 %v1115, 1.442695
        %v1142 = vpow.pop %v1141
        %v1143 = vmul.f32 %v1116, 1.442695
        %v1144 = vpow.pop %v1143
        %v1145 = vmul.f32 %v1117, 1.442695
        %v1146 = vpow.pop %v1145
        %v1147 = vmul.f32 %v1118, 1.442695
        %v1148 = vpow.pop %v1147
        %v1149 = vmul.f32 %v1119, 1.442695
        %v1150 = vpow.pop %v1149
        %v1151 = vmul.f32 %v1120, 1.442695
        %v1152 = vpow.pop %v1151
        %v1153 = vmul.f32 %v1121, 1.442695
        %v1154 = vpow.pop %v1153
        %v1155 = vmul.f32 %v1122, 1.442695
        %v1156 = vpow.pop %v1155
        %v1157 = vmul.f32 %v1123, 1.442695
        %v1158 = vpow.pop %v1157
        %v1159 = vmul.f32 %v1124, 1.442695
        %v1160 = vpow.pop %v1159
        %v1161 = vmul.f32 %v1125, 1.442695
        %v1162 = vpow.pop %v1161
        %v1163 = vmul.f32 %v1126, 1.442695
        %v1164 = vpow.pop %v1163
        %v1165 = vmul.f32 %v1127, 1.442695
        %v1166 = vpow.pop %v1165
        %v1167 = vmul.f32 %v1128, 1.442695
        %v1168 = vpow.pop %v1167
        %v1169 = vmul.f32 %v1129, 1.442695
        %v1170 = vpow.pop %v1169
        %v1171 = vmul.f32 %v1130, 1.442695
        %v1172 = vpow.pop %v1171
        %v1173 = vmul.f32 %v1131, 1.442695
        %v1174 = vpow.pop %v1173
        %v1175 = vmul.f32 %v1132, 1.442695
        %v1176 = vpow.pop %v1175
        %v1177 = vmul.f32 %v1133, 1.442695
        %v1178 = vpow.pop %v1177
        %v1179 = vmul.f32 %v1134, 1.442695
        %v1180 = vpow.pop %v1179
        %v1181 = vmul.f32 %v1135, 1.442695
        %v1182 = vpow.pop %v1181
        %v1183 = vmul.f32 %v1136, 1.442695
        %v1184 = vpow.pop %v1183
        %v1185 = vadd.f32 %v1138, 1.0
        %v1186 = vadd.f32 %v1140, 1.0
        %v1187 = vadd.f32 %v1142, 1.0
        %v1188 = vadd.f32 %v1144, 1.0
        %v1189 = vadd.f32 %v1146, 1.0
        %v1190 = vadd.f32 %v1148, 1.0
        %v1191 = vadd.f32 %v1150, 1.0
        %v1192 = vadd.f32 %v1152, 1.0
        %v1193 = vadd.f32 %v1154, 1.0
        %v1194 = vadd.f32 %v1156, 1.0
        %v1195 = vadd.f32 %v1158, 1.0
        %v1196 = vadd.f32 %v1160, 1.0
        %v1197 = vadd.f32 %v1162, 1.0
        %v1198 = vadd.f32 %v1164, 1.0
        %v1199 = vadd.f32 %v1166, 1.0
        %v1200 = vadd.f32 %v1168, 1.0
        %v1201 = vadd.f32 %v1170, 1.0
        %v1202 = vadd.f32 %v1172, 1.0
        %v1203 = vadd.f32 %v1174, 1.0
        %v1204 = vadd.f32 %v1176, 1.0
        %v1205 = vadd.f32 %v1178, 1.0
        %v1206 = vadd.f32 %v1180, 1.0
        %v1207 = vadd.f32 %v1182, 1.0
        %v1208 = vadd.f32 %v1184, 1.0
        %v1209 = vrcp.pop %v1185
        %v1210 = vmul.f32 1.0, %v1209
        %v1211 = vrcp.pop %v1186
        %v1212 = vmul.f32 1.0, %v1211
        %v1213 = vrcp.pop %v1187
        %v1214 = vmul.f32 1.0, %v1213
        %v1215 = vrcp.pop %v1188
        %v1216 = vmul.f32 1.0, %v1215
        %v1217 = vrcp.pop %v1189
        %v1218 = vmul.f32 1.0, %v1217
        %v1219 = vrcp.pop %v1190
        %v1220 = vmul.f32 1.0, %v1219
        %v1221 = vrcp.pop %v1191
        %v1222 = vmul.f32 1.0, %v1221
        %v1223 = vrcp.pop %v1192
        %v1224 = vmul.f32 1.0, %v1223
        %v1225 = vrcp.pop %v1193
        %v1226 = vmul.f32 1.0, %v1225
        %v1227 = vrcp.pop %v1194
        %v1228 = vmul.f32 1.0, %v1227
        %v1229 = vrcp.pop %v1195
        %v1230 = vmul.f32 1.0, %v1229
        %v1231 = vrcp.pop %v1196
        %v1232 = vmul.f32 1.0, %v1231
        %v1233 = vrcp.pop %v1197
        %v1234 = vmul.f32 1.0, %v1233
        %v1235 = vrcp.pop %v1198
        %v1236 = vmul.f32 1.0, %v1235
        %v1237 = vrcp.pop %v1199
        %v1238 = vmul.f32 1.0, %v1237
        %v1239 = vrcp.pop %v1200
        %v1240 = vmul.f32 1.0, %v1239
        %v1241 = vrcp.pop %v1201
        %v1242 = vmul.f32 1.0, %v1241
        %v1243 = vrcp.pop %v1202
        %v1244 = vmul.f32 1.0, %v1243
        %v1245 = vrcp.pop %v1203
        %v1246 = vmul.f32 1.0, %v1245
        %v1247 = vrcp.pop %v1204
        %v1248 = vmul.f32 1.0, %v1247
        %v1249 = vrcp.pop %v1205
        %v1250 = vmul.f32 1.0, %v1249
        %v1251 = vrcp.pop %v1206
        %v1252 = vmul.f32 1.0, %v1251
        %v1253 = vrcp.pop %v1207
        %v1254 = vmul.f32 1.0, %v1253
        %v1255 = vrcp.pop %v1208
        %v1256 = vmul.f32 1.0, %v1255
        %vm1257 = vcmask 31744
        %1258 = vst.msk [vmem:[%s335] sm:$0xff] %vm1257, %v1210
        %1259 = vst.msk [vmem:[%s335 + $0x8] sm:$0xff] %vm1257, %v1212
        %1260 = vst.msk [vmem:[%s335 + $0x10] sm:$0xff] %vm1257, %v1214
        %1261 = vst.msk [vmem:[%s335 + $0x18] sm:$0xff] %vm1257, %v1216
        %1262 = vst.msk [vmem:[%s335 + $0x20] sm:$0xff] %vm1257, %v1218
        %1263 = vst.msk [vmem:[%s335 + $0x28] sm:$0xff] %vm1257, %v1220
        %1264 = vst.msk [vmem:[%s335 + $0x30] sm:$0xff] %vm1257, %v1222
        %1265 = vst.msk [vmem:[%s335 + $0x38] sm:$0xff] %vm1257, %v1224
        %1266 = vst.msk [vmem:[%s335 + $0x40] sm:$0xff] %vm1257, %v1226
        %1267 = vst.msk [vmem:[%s335 + $0x48] sm:$0xff] %vm1257, %v1228
        %1268 = vst.msk [vmem:[%s335 + $0x50] sm:$0xff] %vm1257, %v1230
        %1269 = vst.msk [vmem:[%s335 + $0x58] sm:$0xff] %vm1257, %v1232
        %1270 = vst.msk [vmem:[%s335 + $0x60] sm:$0xff] %vm1257, %v1234
        %1271 = vst.msk [vmem:[%s335 + $0x68] sm:$0xff] %vm1257, %v1236
        %1272 = vst.msk [vmem:[%s335 + $0x70] sm:$0xff] %vm1257, %v1238
        %1273 = vst.msk [vmem:[%s335 + $0x78] sm:$0xff] %vm1257, %v1240
        %1274 = vst.msk [vmem:[%s335 + $0x80] sm:$0xff] %vm1257, %v1242
        %1275 = vst.msk [vmem:[%s335 + $0x88] sm:$0xff] %vm1257, %v1244
        %1276 = vst.msk [vmem:[%s335 + $0x90] sm:$0xff] %vm1257, %v1246
        %1277 = vst.msk [vmem:[%s335 + $0x98] sm:$0xff] %vm1257, %v1248
        %1278 = vst.msk [vmem:[%s335 + $0xa0] sm:$0xff] %vm1257, %v1250
        %1279 = vst.msk [vmem:[%s335 + $0xa8] sm:$0xff] %vm1257, %v1252
        %1280 = vst.msk [vmem:[%s335 + $0xb0] sm:$0xff] %vm1257, %v1254
        %1281 = vst.msk [vmem:[%s335 + $0xb8] sm:$0xff] %vm1257, %v1256
        %s1282 = sand.u32 %s205, 1
        %s1283 = sand.u32 %s205, 1
        %s1284 = smul.addr %s1283, 192
        %s1285 = scalar_lea.vmem [#allocation2], %s1284
        // Predicated region
        $region53: #{link_predictor_forward.1} parent=51 // pred_check
          %p1286 = pneg %p215
        $region54: #{link_predictor_forward.1} parent=51 // pred_check_branch
          %1288 = sbr.rel (%p1286) target = $region56
        $region55: #{link_predictor_forward.1} parent=51 // pred_region
          %s1289 = smul.u32 24, %s19
          %s1290 = ssub.s32 94, %s1289
          %p1291 = scmp.lt.s32.totalorder %s1290, 24
          %s1292 = scalar_select %p1291, %s1290, 24
          %s1293 = smul.u32 128, %s1292
          %p1294 = scmp.ne.s32.totalorder 0, %s1293
          %s1295 = smul.addr %s1289, 8
          %s1296 = scalar_lea.vmem %s8, %s1295
          // Predicated region
          $region57: #{link_predictor_forward.1} parent=55 // pred_check
            %p1297 = pneg %p1294
          $region58: #{link_predictor_forward.1} parent=55 // pred_check_branch
            %1299 = sbr.rel (%p1297) target = $region60
          $region59: #{link_predictor_forward.1} parent=55 // pred_region
            // Predicated region
            $region61: #{link_predictor_forward.1} parent=59 // pred_check
              _
            $region62: #{link_predictor_forward.1} parent=59 // pred_check_branch
              %1301 = sbr.rel (0) target = $region64
            $region63: #{link_predictor_forward.1} parent=59 // pred_region
              // Predicated region
              $region83: #{link_predictor_forward.1} parent=63 // pred_check
                _
              $region84: #{link_predictor_forward.1} parent=63 // pred_check_branch
                %1397 = sbr.rel (0) target = $region86
              $region85: #{link_predictor_forward.1} parent=63 // pred_region
                %s1398 = sdiv.u32.pop %s1292, 24
                %s1399 = srem.u32.pop %s1292, 24
                // While loop
                $region87: #{link_predictor_forward.1} parent=85 // loop_pre_header
                  _
                $region88: #{link_predictor_forward.1} parent=85 // loop_header
                  %s1401 = sphi 0, %s1403
                  %p1402 = scmp.ge.s32.totalorder %s1401, %s1398
                  %s1406 = sphi 0, %s1459
                  %s1407 = sphi %s1285, %s1462
                  %s1408 = sphi %s1296, %s1463
                $region89: #{link_predictor_forward.1} parent=85 // loop_header_branch
                  %1405 = sbr.rel (%p1402) target = $region93
                $region90: #{link_predictor_forward.1} parent=85 // loop_body
                  %v1409 = vld [vmem:[%s1407] sm:$0xff]
                  %1410 = vst [vmem:[%s1408] sm:$0xff] %v1409
                  %v1411 = vld [vmem:[%s1407 + $0x8] sm:$0xff]
                  %1412 = vst [vmem:[%s1408 + $0x8] sm:$0xff] %v1411
                  %v1413 = vld [vmem:[%s1407 + $0x10] sm:$0xff]
                  %1414 = vst [vmem:[%s1408 + $0x10] sm:$0xff] %v1413
                  %v1415 = vld [vmem:[%s1407 + $0x18] sm:$0xff]
                  %1416 = vst [vmem:[%s1408 + $0x18] sm:$0xff] %v1415
                  %v1417 = vld [vmem:[%s1407 + $0x20] sm:$0xff]
                  %1418 = vst [vmem:[%s1408 + $0x20] sm:$0xff] %v1417
                  %v1419 = vld [vmem:[%s1407 + $0x28] sm:$0xff]
                  %1420 = vst [vmem:[%s1408 + $0x28] sm:$0xff] %v1419
                  %v1421 = vld [vmem:[%s1407 + $0x30] sm:$0xff]
                  %1422 = vst [vmem:[%s1408 + $0x30] sm:$0xff] %v1421
                  %v1423 = vld [vmem:[%s1407 + $0x38] sm:$0xff]
                  %1424 = vst [vmem:[%s1408 + $0x38] sm:$0xff] %v1423
                  %v1425 = vld [vmem:[%s1407 + $0x40] sm:$0xff]
                  %1426 = vst [vmem:[%s1408 + $0x40] sm:$0xff] %v1425
                  %v1427 = vld [vmem:[%s1407 + $0x48] sm:$0xff]
                  %1428 = vst [vmem:[%s1408 + $0x48] sm:$0xff] %v1427
                  %v1429 = vld [vmem:[%s1407 + $0x50] sm:$0xff]
                  %1430 = vst [vmem:[%s1408 + $0x50] sm:$0xff] %v1429
                  %v1431 = vld [vmem:[%s1407 + $0x58] sm:$0xff]
                  %1432 = vst [vmem:[%s1408 + $0x58] sm:$0xff] %v1431
                  %v1433 = vld [vmem:[%s1407 + $0x60] sm:$0xff]
                  %1434 = vst [vmem:[%s1408 + $0x60] sm:$0xff] %v1433
                  %v1435 = vld [vmem:[%s1407 + $0x68] sm:$0xff]
                  %1436 = vst [vmem:[%s1408 + $0x68] sm:$0xff] %v1435
                  %v1437 = vld [vmem:[%s1407 + $0x70] sm:$0xff]
                  %1438 = vst [vmem:[%s1408 + $0x70] sm:$0xff] %v1437
                  %v1439 = vld [vmem:[%s1407 + $0x78] sm:$0xff]
                  %1440 = vst [vmem:[%s1408 + $0x78] sm:$0xff] %v1439
                  %v1441 = vld [vmem:[%s1407 + $0x80] sm:$0xff]
                  %1442 = vst [vmem:[%s1408 + $0x80] sm:$0xff] %v1441
                  %v1443 = vld [vmem:[%s1407 + $0x88] sm:$0xff]
                  %1444 = vst [vmem:[%s1408 + $0x88] sm:$0xff] %v1443
                  %v1445 = vld [vmem:[%s1407 + $0x90] sm:$0xff]
                  %1446 = vst [vmem:[%s1408 + $0x90] sm:$0xff] %v1445
                  %v1447 = vld [vmem:[%s1407 + $0x98] sm:$0xff]
                  %1448 = vst [vmem:[%s1408 + $0x98] sm:$0xff] %v1447
                  %v1449 = vld [vmem:[%s1407 + $0xa0] sm:$0xff]
                  %1450 = vst [vmem:[%s1408 + $0xa0] sm:$0xff] %v1449
                  %v1451 = vld [vmem:[%s1407 + $0xa8] sm:$0xff]
                  %1452 = vst [vmem:[%s1408 + $0xa8] sm:$0xff] %v1451
                  %v1453 = vld [vmem:[%s1407 + $0xb0] sm:$0xff]
                  %1454 = vst [vmem:[%s1408 + $0xb0] sm:$0xff] %v1453
                  %v1455 = vld [vmem:[%s1407 + $0xb8] sm:$0xff]
                  %1456 = vst [vmem:[%s1408 + $0xb8] sm:$0xff] %v1455
                  %s1457 = sadd.s32 1, %s1406
                  %p1458 = scmp.ge.s32.totalorder %s1457, %s1398
                  %s1459 = scalar_select %p1458, 0, %s1457
                  %s1460 = smul.u32 %s1459, 192
                  %s1461 = smul.u32 %s1459, 192
                  %s1462 = scalar_lea.vmem %s1285, %s1460 [#allocation2]
                  %s1463 = scalar_lea.vmem %s1296, %s1461
                $region91: #{link_predictor_forward.1} parent=85 // loop_footer
                  %s1403 = sadd.s32 %s1401, 1
                $region92: #{link_predictor_forward.1} parent=85 // loop_footer_branch
                  %1400 = sbr.rel target = $region88
                $region93: #{link_predictor_forward.1} parent=85 // loop_exit
                  _
                %s1464 = sdiv.u32.pop %s1292, 24
                %s1465 = srem.u32.pop %s1292, 24
                %s1466 = smul.u32 %s1464, 24
                %s1467 = smul.u32 8, %s1466
                %s1468 = scalar_lea.vmem %s1285, %s1467 [#allocation2]
                %s1469 = smul.u32 8, %s1466
                %s1470 = scalar_lea.vmem %s1296, %s1469
                // While loop
                $region94: #{link_predictor_forward.1} parent=85 // loop_pre_header
                  _
                $region95: #{link_predictor_forward.1} parent=85 // loop_header
                  %s1472 = sphi 0, %s1474
                  %p1473 = scmp.ge.s32.totalorder %s1472, %s1465
                  %s1477 = sphi 0, %s1484
                  %s1478 = sphi %s1468, %s1487
                  %s1479 = sphi %s1470, %s1488
                $region96: #{link_predictor_forward.1} parent=85 // loop_header_branch
                  %1476 = sbr.rel (%p1473) target = $region100
                $region97: #{link_predictor_forward.1} parent=85 // loop_body
                  %v1480 = vld [vmem:[%s1478] sm:$0xff]
                  %1481 = vst [vmem:[%s1479] sm:$0xff] %v1480
                  %s1482 = sadd.s32 1, %s1477
                  %p1483 = scmp.ge.s32.totalorder %s1482, %s1465
                  %s1484 = scalar_select %p1483, 0, %s1482
                  %s1485 = smul.u32 %s1484, 8
                  %s1486 = smul.u32 %s1484, 8
                  %s1487 = scalar_lea.vmem %s1468, %s1485 [#allocation2]
                  %s1488 = scalar_lea.vmem %s1470, %s1486
                $region98: #{link_predictor_forward.1} parent=85 // loop_footer
                  %s1474 = sadd.s32 %s1472, 1
                $region99: #{link_predictor_forward.1} parent=85 // loop_footer_branch
                  %1471 = sbr.rel target = $region95
                $region100: #{link_predictor_forward.1} parent=85 // loop_exit
                  _
              $region86: #{link_predictor_forward.1} parent=63 // pred_fallthru
                _
              // Predicated region
              $region101: #{link_predictor_forward.1} parent=63 // pred_check
                _
              $region102: #{link_predictor_forward.1} parent=63 // pred_check_branch
                %1490 = sbr.rel target = $region104
              $region103: #{link_predictor_forward.1} parent=63 // pred_region
                _
              $region104: #{link_predictor_forward.1} parent=63 // pred_fallthru
                _
            $region64: #{link_predictor_forward.1} parent=59 // pred_fallthru
              _
            // Predicated region
            $region65: #{link_predictor_forward.1} parent=59 // pred_check
              _
            $region66: #{link_predictor_forward.1} parent=59 // pred_check_branch
              %1303 = sbr.rel target = $region68
            $region67: #{link_predictor_forward.1} parent=59 // pred_region
              %s1305 = sdiv.u32.pop %s1292, 24
              %s1306 = srem.u32.pop %s1292, 24
              // While loop
              $region69: #{link_predictor_forward.1} parent=67 // loop_pre_header
                _
              $region70: #{link_predictor_forward.1} parent=67 // loop_header
                %s1308 = sphi 0, %s1310
                %p1309 = scmp.ge.s32.totalorder %s1308, %s1305
                %s1313 = sphi 0, %s1366
                %s1314 = sphi %s1285, %s1369
                %s1315 = sphi %s1296, %s1370
              $region71: #{link_predictor_forward.1} parent=67 // loop_header_branch
                %1312 = sbr.rel (%p1309) target = $region75
              $region72: #{link_predictor_forward.1} parent=67 // loop_body
                %v1316 = vld [vmem:[%s1314] sm:$0xff]
                %1317 = vst [vmem:[%s1315] sm:$0xff] %v1316
                %v1318 = vld [vmem:[%s1314 + $0x8] sm:$0xff]
                %1319 = vst [vmem:[%s1315 + $0x8] sm:$0xff] %v1318
                %v1320 = vld [vmem:[%s1314 + $0x10] sm:$0xff]
                %1321 = vst [vmem:[%s1315 + $0x10] sm:$0xff] %v1320
                %v1322 = vld [vmem:[%s1314 + $0x18] sm:$0xff]
                %1323 = vst [vmem:[%s1315 + $0x18] sm:$0xff] %v1322
                %v1324 = vld [vmem:[%s1314 + $0x20] sm:$0xff]
                %1325 = vst [vmem:[%s1315 + $0x20] sm:$0xff] %v1324
                %v1326 = vld [vmem:[%s1314 + $0x28] sm:$0xff]
                %1327 = vst [vmem:[%s1315 + $0x28] sm:$0xff] %v1326
                %v1328 = vld [vmem:[%s1314 + $0x30] sm:$0xff]
                %1329 = vst [vmem:[%s1315 + $0x30] sm:$0xff] %v1328
                %v1330 = vld [vmem:[%s1314 + $0x38] sm:$0xff]
                %1331 = vst [vmem:[%s1315 + $0x38] sm:$0xff] %v1330
                %v1332 = vld [vmem:[%s1314 + $0x40] sm:$0xff]
                %1333 = vst [vmem:[%s1315 + $0x40] sm:$0xff] %v1332
                %v1334 = vld [vmem:[%s1314 + $0x48] sm:$0xff]
                %1335 = vst [vmem:[%s1315 + $0x48] sm:$0xff] %v1334
                %v1336 = vld [vmem:[%s1314 + $0x50] sm:$0xff]
                %1337 = vst [vmem:[%s1315 + $0x50] sm:$0xff] %v1336
                %v1338 = vld [vmem:[%s1314 + $0x58] sm:$0xff]
                %1339 = vst [vmem:[%s1315 + $0x58] sm:$0xff] %v1338
                %v1340 = vld [vmem:[%s1314 + $0x60] sm:$0xff]
                %1341 = vst [vmem:[%s1315 + $0x60] sm:$0xff] %v1340
                %v1342 = vld [vmem:[%s1314 + $0x68] sm:$0xff]
                %1343 = vst [vmem:[%s1315 + $0x68] sm:$0xff] %v1342
                %v1344 = vld [vmem:[%s1314 + $0x70] sm:$0xff]
                %1345 = vst [vmem:[%s1315 + $0x70] sm:$0xff] %v1344
                %v1346 = vld [vmem:[%s1314 + $0x78] sm:$0xff]
                %1347 = vst [vmem:[%s1315 + $0x78] sm:$0xff] %v1346
                %v1348 = vld [vmem:[%s1314 + $0x80] sm:$0xff]
                %1349 = vst [vmem:[%s1315 + $0x80] sm:$0xff] %v1348
                %v1350 = vld [vmem:[%s1314 + $0x88] sm:$0xff]
                %1351 = vst [vmem:[%s1315 + $0x88] sm:$0xff] %v1350
                %v1352 = vld [vmem:[%s1314 + $0x90] sm:$0xff]
                %1353 = vst [vmem:[%s1315 + $0x90] sm:$0xff] %v1352
                %v1354 = vld [vmem:[%s1314 + $0x98] sm:$0xff]
                %1355 = vst [vmem:[%s1315 + $0x98] sm:$0xff] %v1354
                %v1356 = vld [vmem:[%s1314 + $0xa0] sm:$0xff]
                %1357 = vst [vmem:[%s1315 + $0xa0] sm:$0xff] %v1356
                %v1358 = vld [vmem:[%s1314 + $0xa8] sm:$0xff]
                %1359 = vst [vmem:[%s1315 + $0xa8] sm:$0xff] %v1358
                %v1360 = vld [vmem:[%s1314 + $0xb0] sm:$0xff]
                %1361 = vst [vmem:[%s1315 + $0xb0] sm:$0xff] %v1360
                %v1362 = vld [vmem:[%s1314 + $0xb8] sm:$0xff]
                %1363 = vst [vmem:[%s1315 + $0xb8] sm:$0xff] %v1362
                %s1364 = sadd.s32 1, %s1313
                %p1365 = scmp.ge.s32.totalorder %s1364, %s1305
                %s1366 = scalar_select %p1365, 0, %s1364
                %s1367 = smul.u32 %s1366, 192
                %s1368 = smul.u32 %s1366, 192
                %s1369 = scalar_lea.vmem %s1285, %s1367 [#allocation2]
                %s1370 = scalar_lea.vmem %s1296, %s1368
              $region73: #{link_predictor_forward.1} parent=67 // loop_footer
                %s1310 = sadd.s32 %s1308, 1
              $region74: #{link_predictor_forward.1} parent=67 // loop_footer_branch
                %1307 = sbr.rel target = $region70
              $region75: #{link_predictor_forward.1} parent=67 // loop_exit
                _
              %s1371 = sdiv.u32.pop %s1292, 24
              %s1372 = srem.u32.pop %s1292, 24
              %s1373 = smul.u32 %s1371, 24
              %s1374 = smul.u32 8, %s1373
              %s1375 = scalar_lea.vmem %s1285, %s1374 [#allocation2]
              %s1376 = smul.u32 8, %s1373
              %s1377 = scalar_lea.vmem %s1296, %s1376
              // While loop
              $region76: #{link_predictor_forward.1} parent=67 // loop_pre_header
                _
              $region77: #{link_predictor_forward.1} parent=67 // loop_header
                %s1379 = sphi 0, %s1381
                %p1380 = scmp.ge.s32.totalorder %s1379, %s1372
                %s1384 = sphi 0, %s1391
                %s1385 = sphi %s1375, %s1394
                %s1386 = sphi %s1377, %s1395
              $region78: #{link_predictor_forward.1} parent=67 // loop_header_branch
                %1383 = sbr.rel (%p1380) target = $region82
              $region79: #{link_predictor_forward.1} parent=67 // loop_body
                %v1387 = vld [vmem:[%s1385] sm:$0xff]
                %1388 = vst [vmem:[%s1386] sm:$0xff] %v1387
                %s1389 = sadd.s32 1, %s1384
                %p1390 = scmp.ge.s32.totalorder %s1389, %s1372
                %s1391 = scalar_select %p1390, 0, %s1389
                %s1392 = smul.u32 %s1391, 8
                %s1393 = smul.u32 %s1391, 8
                %s1394 = scalar_lea.vmem %s1375, %s1392 [#allocation2]
                %s1395 = scalar_lea.vmem %s1377, %s1393
              $region80: #{link_predictor_forward.1} parent=67 // loop_footer
                %s1381 = sadd.s32 %s1379, 1
              $region81: #{link_predictor_forward.1} parent=67 // loop_footer_branch
                %1378 = sbr.rel target = $region77
              $region82: #{link_predictor_forward.1} parent=67 // loop_exit
                _
            $region68: #{link_predictor_forward.1} parent=59 // pred_fallthru
              _
          $region60: #{link_predictor_forward.1} parent=55 // pred_fallthru
            _
          %1491 = vnop
        $region56: #{link_predictor_forward.1} parent=51 // pred_fallthru
          _
      $region52: #{link_predictor_forward.1} parent=5 // pred_fallthru
        _
      %p1492 = scmp.le.s32.totalorder 2, %s14
      // Predicated region
      $region105: #{link_predictor_forward.1} parent=5 // pred_check
        %p1493 = pneg %p1492
      $region106: #{link_predictor_forward.1} parent=5 // pred_check_branch
        %1495 = sbr.rel (%p1493) target = $region108
      $region107: #{link_predictor_forward.1} parent=5 // pred_region
        %s1496 = ssub.s32 %s14, 2
        // Predicated region
        $region109: #{link_predictor_forward.1} parent=107 // pred_check
          %p1497 = pneg %p221
        $region110: #{link_predictor_forward.1} parent=107 // pred_check_branch
          %1499 = sbr.rel (%p1497) target = $region112
        $region111: #{link_predictor_forward.1} parent=107 // pred_region
          %s1500 = sand.u32 %s206, 1
          %s1501 = sand.u32 %s206, 1
          %s1502 = smul.addr %s1501, 192
          %s1503 = scalar_lea.vmem [#allocation2], %s1502
        $region112: #{link_predictor_forward.1} parent=107 // pred_fallthru
          _
      $region108: #{link_predictor_forward.1} parent=5 // pred_fallthru
        _
    $region6: #{link_predictor_forward.1} parent=1 // loop_footer
      %s18 = sadd.s32 1, %s14
    $region7: #{link_predictor_forward.1} parent=1 // loop_footer_branch
      %13 = sbr.rel target = $region3
    $region8: #{link_predictor_forward.1} parent=1 // loop_exit
      _

</llo_original>
